<compile_context>
chip_gen: v6e
topology: v6e:2x2x1
jax: 0.10.0
libtpu: 0.0.40
codegen_flags: <defaults>
</compile_context>

<pallas_src>
import math

import jax
import jax.numpy as jnp
from jax import lax
from jax.experimental import pallas as pl
from jax.experimental.pallas import tpu as pltpu


# ----------------------------------------------------------------------------
# Kernel
# ----------------------------------------------------------------------------
def _neural_memory_kernel(
    x_ref,      # (1, S, D)   full sequence slab (resident across query tiles)
    gamma_ref,  # (1, D)      LayerNorm weight
    beta_ref,   # (1, D)      LayerNorm bias
    wq_ref,     # (D, D)      to_q weight   (x @ W convention)
    wk_ref,     # (D, D)      to_k weight
    wv_ref,     # (D, D)      to_v weight
    wo_ref,     # (D, D)      to_out weight
    bo_ref,     # (1, D)      to_out bias
    out_ref,    # (1, TQ, D)  output tile
    attn_ref,   # (1, TQ, S)  attention tile (MemoryUpdates)
    q_scr,      # (S, D)      VMEM scratch: Q for the whole batch element
    k_scr,      # (S, D)      VMEM scratch: K
    v_scr,      # (S, D)      VMEM scratch: V
):
    eps = 1e-5
    d_model = wq_ref.shape[0]
    scale = 1.0 / math.sqrt(float(d_model))
    qi = pl.program_id(1)

    # ---- Hoisted LayerNorm + Q/K/V projections: once per batch element. ----
    @pl.when(qi == 0)
    def _project_once_per_batch():
        x = x_ref[0].astype(jnp.float32)                    # (S, D), LN math in f32
        mean = jnp.mean(x, axis=-1, keepdims=True)
        xc = x - mean
        var = jnp.mean(xc * xc, axis=-1, keepdims=True)
        ln = xc * lax.rsqrt(var + eps)
        ln = (ln * gamma_ref[...].astype(jnp.float32)
              + beta_ref[...].astype(jnp.float32))
        # MXU operands in the model dtype (bf16 stays bf16); accumulate in f32.
        ln = ln.astype(wq_ref.dtype)
        q_scr[...] = jnp.dot(ln, wq_ref[...],
                             preferred_element_type=jnp.float32).astype(q_scr.dtype)
        k_scr[...] = jnp.dot(ln, wk_ref[...],
                             preferred_element_type=jnp.float32).astype(k_scr.dtype)
        v_scr[...] = jnp.dot(ln, wv_ref[...],
                             preferred_element_type=jnp.float32).astype(v_scr.dtype)

    tq = out_ref.shape[1]
    s = attn_ref.shape[2]

    # Query rows for this tile come straight from the resident Q scratch.
    q_start = pl.multiple_of(qi * tq, tq)
    q = q_scr[pl.ds(q_start, tq), :]                        # (TQ, D)

    # sim = q @ k^T * scale — contract on the feature dim (no transpose copy).
    sim = lax.dot_general(
        q, k_scr[...], dimension_numbers=(((1,), (1,)), ((), ())),
        preferred_element_type=jnp.float32) * scale         # (TQ, S) f32

    # Causal mask (strict upper triangle -> -finfo.max), offset by the q tile.
    row = qi * tq + lax.broadcasted_iota(jnp.int32, (tq, s), 0)
    col = lax.broadcasted_iota(jnp.int32, (tq, s), 1)
    sim = jnp.where(col > row, -jnp.finfo(jnp.float32).max, sim)
    # TODO(synk): fully-masked KV column blocks (kj > qi) could skip the QK^T /
    # exp work entirely (zeros written directly); kept as compute-then-mask.

    # Numerically-stable softmax; divide replaced by pl.reciprocal (exact).
    m = jnp.max(sim, axis=-1, keepdims=True)
    p = jnp.exp(sim - m)
    denom = jnp.sum(p, axis=-1, keepdims=True)
    attn = p * pl.reciprocal(denom)                         # (TQ, S) f32

    attn_ref[0] = attn.astype(attn_ref.dtype)

    # out = (attn @ v) @ Wo + bo — MXU operands in model dtype, f32 accumulate.
    pv = jnp.dot(attn.astype(v_scr.dtype), v_scr[...],
                 preferred_element_type=jnp.float32)        # (TQ, D)
    out = jnp.dot(pv.astype(wo_ref.dtype), wo_ref[...],
                  preferred_element_type=jnp.float32)
    out = out + bo_ref[...].astype(jnp.float32)
    out_ref[0] = out.astype(out_ref.dtype)


# ----------------------------------------------------------------------------
# Wrapper / pallas_call construction
# ----------------------------------------------------------------------------
def _pick_q_tile(seq_len: int) -> int:
    """Largest query tile (multiple of 8, <=256) dividing seq_len, else full seq."""
    if seq_len <= 256:
        return seq_len
    for t in (256, 128, 64, 32, 16, 8):
        if seq_len % t == 0:
            return t
    # TODO(synk): pad + mask awkward sequence lengths instead of full-S tiles.
    return seq_len


def _estimate_vmem_bytes(S, D, tq, itemsize):
    wse = 0
    wse += S * D * itemsize            # x slab (single-buffered)
    wse += 4 * D * D * itemsize        # weight matrices
    wse += 3 * S * D * itemsize        # q/k/v scratch
    wse += 2 * tq * D * itemsize       # out tile (double-buffered)
    wse += 2 * tq * S * itemsize       # attn tile (double-buffered)
    wse += (S * D + 2 * tq * S + tq * D) * 4   # f32 temporaries (ln, sim/p, pv)
    return wse


def _build_call(B, S, D, dtype, tq, use_buffered):
    num_q_tiles = S // tq
    # Constant-index operands: keep a single VMEM buffer (no double-buffering).
    resident = {"pipeline_mode": pl.Buffered(1)} if use_buffered else {}

    x_spec = pl.BlockSpec((1, S, D), lambda b, qi: (b, 0, 0), **resident)
    vec_spec = pl.BlockSpec((1, D), lambda b, qi: (0, 0), **resident)
    mat_spec = pl.BlockSpec((D, D), lambda b, qi: (0, 0), **resident)
    out_spec = pl.BlockSpec((1, tq, D), lambda b, qi: (b, qi, 0))
    attn_spec = pl.BlockSpec((1, tq, S), lambda b, qi: (b, qi, 0))

    itemsize = jnp.dtype(dtype).itemsize
    vmem_limit = _estimate_vmem_bytes(S, D, tq, itemsize)
    vmem_limit = int(min(max(2 * vmem_limit + (4 << 20), 32 << 20), 64 << 20))

    return pl.pallas_call(
        _neural_memory_kernel,
        out_shape=(
            jax.ShapeDtypeStruct((B, S, D), dtype),
            jax.ShapeDtypeStruct((B, S, S), dtype),
        ),
        grid_spec=pltpu.PrefetchScalarGridSpec(
            num_scalar_prefetch=0,
            grid=(B, num_q_tiles),
            in_specs=[x_spec, vec_spec, vec_spec,
                      mat_spec, mat_spec, mat_spec, mat_spec, vec_spec],
            out_specs=[out_spec, attn_spec],
            scratch_shapes=[pltpu.VMEM((S, D), dtype)] * 3,
        ),
        compiler_params=pltpu.CompilerParams(
            # batch axis is independent (megacore-shardable); qi carries the
            # per-batch Q/K/V scratch so it must be "arbitrary".
            dimension_semantics=("parallel", "arbitrary"),
            vmem_limit_bytes=vmem_limit,
        ),
    )


def neural_memory_forward(x, gamma, beta, wq, wk, wv, wo, bo):
    """Fused LayerNorm + QKV + causal attention + output projection."""
    B, S, D = x.shape
    assert gamma.shape == (D,) and beta.shape == (D,)
    assert wq.shape == (D, D) and wk.shape == (D, D)
    assert wv.shape == (D, D) and wo.shape == (D, D) and bo.shape == (D,)

    tq = _pick_q_tile(S)
    assert S % tq == 0

    gamma2 = gamma.reshape(1, D)
    beta2 = beta.reshape(1, D)
    bo2 = bo.reshape(1, D)
    args = (x, gamma2, beta2, wq, wk, wv, wo, bo2)

    try:
        return _build_call(B, S, D, x.dtype, tq, use_buffered=True)(*args)
    except Exception:
        # pipeline_mode=pl.Buffered may be unsupported on this jax/libtpu
        # version; fall back to default double-buffering (correct, more VMEM).
        return _build_call(B, S, D, x.dtype, tq, use_buffered=False)(*args)


# ----------------------------------------------------------------------------
# Module wrapper (mirrors the PyTorch NeuralMemory interface)
# ----------------------------------------------------------------------------
class MemoryUpdates:
    def __init__(self, updates):
        self.updates = updates


class NeuralMemory:
    """JAX/Pallas port of the Titans NeuralMemory forward pass (default config)."""

    def __init__(self, dim: int, chunk_size: int, key, dtype=jnp.float32):
        self.dim = dim
        self.chunk_size = chunk_size
        k1, k2, k3, k4, k5 = jax.random.split(key, 5)
        bound = 1.0 / math.sqrt(dim)

        def lin(k):  # x @ W convention (== torch Linear weight transposed)
            return jax.random.uniform(k, (dim, dim), dtype, -bound, bound)

        self.wq = lin(k1)
        self.wk = lin(k2)
        self.wv = lin(k3)
        self.wo = lin(k4)
        self.bo = jax.random.uniform(k5, (dim,), dtype, -bound, bound)
        self.gamma = jnp.ones((dim,), dtype)
        self.beta = jnp.zeros((dim,), dtype)
        # TODO(synk): the self.model MLP (LayerNorm->Linear->GELU->Linear) is dead
        # code in the reference forward (memory_out is never used) — not built.

    def __call__(self, qkv_inputs, state=None, prev_weights=None):
        # TODO(synk): qkv_receives_diff_views / handle_dim_mismatch / prev_weights
        # residual branches are not implemented (default config only).
        out, attn = neural_memory_forward(
            qkv_inputs, self.gamma, self.beta,
            self.wq, self.wk, self.wv, self.wo, self.bo)
        # TODO(synk): the no_grad stochastic momentum parameter update
        # (torch.randn_like side effect on self.model params) is a stateful RNG
        # mutation that does not affect this forward's outputs — omitted.
        return out, MemoryUpdates(attn)


# ----------------------------------------------------------------------------
# Pure-JAX reference for correctness checking
# ----------------------------------------------------------------------------
def _reference_forward(x, gamma, beta, wq, wk, wv, wo, bo):
    eps = 1e-5
    xf = x.astype(jnp.float32)
    mean = jnp.mean(xf, axis=-1, keepdims=True)
    xc = xf - mean
    var = jnp.mean(xc * xc, axis=-1, keepdims=True)
    n = xc / jnp.sqrt(var + eps) * gamma + beta
    q = n @ wq
    k = n @ wk
    v = n @ wv
    scale = q.shape[-1] ** (-0.5)
    sim = jnp.einsum("bid,bjd->bij", q, k) * scale
    S = x.shape[1]
    mask = jnp.triu(jnp.ones((S, S), dtype=bool), k=1)
    sim = jnp.where(mask[None], -jnp.finfo(jnp.float32).max, sim)
    attn = jax.nn.softmax(sim, axis=-1)
    out = jnp.einsum("bij,bjd->bid", attn, v) @ wo + bo
    return out.astype(x.dtype), attn.astype(x.dtype)


if __name__ == "__main__":
    # Small shapes implied by the module: batch=2, seq=8, hidden(dim)=32.
    key = jax.random.PRNGKey(0)
    k_params, k_x = jax.random.split(key)
    B, S, D = 2, 8, 32

    mem = NeuralMemory(dim=D, chunk_size=4, key=k_params, dtype=jnp.float32)
    x = jax.random.normal(k_x, (B, S, D), dtype=jnp.float32)

    out, mem_updates = mem(x)
    out = jax.block_until_ready(out)
    attn = jax.block_until_ready(mem_updates.updates)

    out_ref, attn_ref = _reference_forward(
        x, mem.gamma, mem.beta, mem.wq, mem.wk, mem.wv, mem.wo, mem.bo)

    assert out.shape == (B, S, D) and attn.shape == (B, S, S)
    assert jnp.allclose(out, out_ref, atol=1e-4, rtol=1e-4), \
        float(jnp.max(jnp.abs(out - out_ref)))
    assert jnp.allclose(attn, attn_ref, atol=1e-4, rtol=1e-4), \
        float(jnp.max(jnp.abs(attn - attn_ref)))
    # Attention rows must be causal and normalized.
    assert jnp.allclose(jnp.sum(attn, axis=-1), 1.0, atol=1e-5)
    assert float(jnp.max(jnp.abs(jnp.triu(attn, k=1)))) < 1e-6

    print("KERNEL_OK")
</pallas_src>

<mosaic_0001>
module attributes {stable_mosaic.version = 11 : i64} {
  func.func @_neural_memory_kernel(%arg0: i32, %arg1: i32, %arg2: memref<1x8x32xf32, #tpu.memory_space<vmem>>, %arg3: memref<1x32xf32, #tpu.memory_space<vmem>>, %arg4: memref<1x32xf32, #tpu.memory_space<vmem>>, %arg5: memref<32x32xf32, #tpu.memory_space<vmem>>, %arg6: memref<32x32xf32, #tpu.memory_space<vmem>>, %arg7: memref<32x32xf32, #tpu.memory_space<vmem>>, %arg8: memref<32x32xf32, #tpu.memory_space<vmem>>, %arg9: memref<1x32xf32, #tpu.memory_space<vmem>>, %arg10: memref<1x8x32xf32, #tpu.memory_space<vmem>>, %arg11: memref<1x8x8xf32, #tpu.memory_space<vmem>>, %arg12: memref<8x32xf32, #tpu.memory_space<vmem>>, %arg13: memref<8x32xf32, #tpu.memory_space<vmem>>, %arg14: memref<8x32xf32, #tpu.memory_space<vmem>>) attributes {dimension_semantics = [#tpu.dimension_semantics<parallel>, #tpu.dimension_semantics<arbitrary>], iteration_bounds = array<i64: 2, 1>, scalar_prefetch = 0 : i64, scratch_operands = 3 : i64, tpu.core_type = #tpu.core_type<tc>, window_params = [{pipeline_mode = #tpu.pipeline_mode<synchronous>, transform_indices = @transform_0, window_bounds = array<i64: 1, 8, 32>}, {pipeline_mode = #tpu.pipeline_mode<synchronous>, transform_indices = @transform_1, window_bounds = array<i64: 1, 32>}, {pipeline_mode = #tpu.pipeline_mode<synchronous>, transform_indices = @transform_2, window_bounds = array<i64: 1, 32>}, {pipeline_mode = #tpu.pipeline_mode<synchronous>, transform_indices = @transform_3, window_bounds = array<i64: 32, 32>}, {pipeline_mode = #tpu.pipeline_mode<synchronous>, transform_indices = @transform_4, window_bounds = array<i64: 32, 32>}, {pipeline_mode = #tpu.pipeline_mode<synchronous>, transform_indices = @transform_5, window_bounds = array<i64: 32, 32>}, {pipeline_mode = #tpu.pipeline_mode<synchronous>, transform_indices = @transform_6, window_bounds = array<i64: 32, 32>}, {pipeline_mode = #tpu.pipeline_mode<synchronous>, transform_indices = @transform_7, window_bounds = array<i64: 1, 32>}, {transform_indices = @transform_8, window_bounds = array<i64: 1, 8, 32>}, {transform_indices = @transform_9, window_bounds = array<i64: 1, 8, 8>}]} {
    %c0_i32 = arith.constant 0 : i32
    %0 = arith.cmpi eq, %arg1, %c0_i32 : i32
    %1 = arith.extui %0 : i1 to i32
    %c0_i32_0 = arith.constant 0 : i32
    %2 = arith.cmpi ne, %1, %c0_i32_0 : i32
    scf.if %2 {
      %c0_22 = arith.constant 0 : index
      %c0_23 = arith.constant 0 : index
      %c0_24 = arith.constant 0 : index
      %42 = vector.load %arg2[%c0_22, %c0_23, %c0_24] : memref<1x8x32xf32, #tpu.memory_space<vmem>>, vector<1x8x32xf32>
      %43 = vector.shape_cast %42 : vector<1x8x32xf32> to vector<8x32xf32>
      %cst_25 = arith.constant dense<0.000000e+00> : vector<8xf32>
      %44 = vector.multi_reduction <add>, %43, %cst_25 [1] : vector<8x32xf32> to vector<8xf32>
      %45 = vector.shape_cast %44 : vector<8xf32> to vector<8x1xf32>
      %cst_26 = arith.constant 3.200000e+01 : f32
      %46 = vector.broadcast %cst_26 : f32 to vector<8x1xf32>
      %47 = arith.divf %45, %46 : vector<8x1xf32>
      %48 = vector.broadcast %47 : vector<8x1xf32> to vector<8x32xf32>
      %49 = arith.subf %43, %48 : vector<8x32xf32>
      %50 = arith.mulf %49, %49 : vector<8x32xf32>
      %cst_27 = arith.constant dense<0.000000e+00> : vector<8xf32>
      %51 = vector.multi_reduction <add>, %50, %cst_27 [1] : vector<8x32xf32> to vector<8xf32>
      %52 = vector.shape_cast %51 : vector<8xf32> to vector<8x1xf32>
      %cst_28 = arith.constant 3.200000e+01 : f32
      %53 = vector.broadcast %cst_28 : f32 to vector<8x1xf32>
      %54 = arith.divf %52, %53 : vector<8x1xf32>
      %cst_29 = arith.constant 9.99999974E-6 : f32
      %55 = vector.broadcast %cst_29 : f32 to vector<8x1xf32>
      %56 = arith.addf %54, %55 : vector<8x1xf32>
      %57 = math.rsqrt %56 : vector<8x1xf32>
      %58 = vector.broadcast %57 : vector<8x1xf32> to vector<8x32xf32>
      %59 = arith.mulf %49, %58 : vector<8x32xf32>
      %c0_30 = arith.constant 0 : index
      %c0_31 = arith.constant 0 : index
      %60 = vector.load %arg3[%c0_30, %c0_31] : memref<1x32xf32, #tpu.memory_space<vmem>>, vector<1x32xf32>
      %61 = vector.broadcast %60 : vector<1x32xf32> to vector<8x32xf32>
      %62 = arith.mulf %59, %61 : vector<8x32xf32>
      %c0_32 = arith.constant 0 : index
      %c0_33 = arith.constant 0 : index
      %63 = vector.load %arg4[%c0_32, %c0_33] : memref<1x32xf32, #tpu.memory_space<vmem>>, vector<1x32xf32>
      %64 = vector.broadcast %63 : vector<1x32xf32> to vector<8x32xf32>
      %65 = arith.addf %62, %64 : vector<8x32xf32>
      %c0_34 = arith.constant 0 : index
      %c0_35 = arith.constant 0 : index
      %66 = vector.load %arg5[%c0_34, %c0_35] : memref<32x32xf32, #tpu.memory_space<vmem>>, vector<32x32xf32>
      %cst_36 = arith.constant dense<0.000000e+00> : vector<8x32xf32>
      %67 = tpu.matmul %65, %66, %cst_36 {dimension_numbers = #tpu.dot_dimension_numbers<[1], [0], [0], [1], [0, 0, 1, 1], [], []>} : vector<8x32xf32>, vector<32x32xf32>, vector<8x32xf32> -> vector<8x32xf32>
      %c0_37 = arith.constant 0 : index
      %c0_38 = arith.constant 0 : index
      %68 = vector.load %arg12[%c0_37, %c0_38] : memref<8x32xf32, #tpu.memory_space<vmem>>, vector<8x32xf32>
      tpu.vector_store %arg12[%c0_37, %c0_38], %67 {strides = array<i32>} : memref<8x32xf32, #tpu.memory_space<vmem>>, vector<8x32xf32>,
      %c0_39 = arith.constant 0 : index
      %c0_40 = arith.constant 0 : index
      %69 = vector.load %arg6[%c0_39, %c0_40] : memref<32x32xf32, #tpu.memory_space<vmem>>, vector<32x32xf32>
      %cst_41 = arith.constant dense<0.000000e+00> : vector<8x32xf32>
      %70 = tpu.matmul %65, %69, %cst_41 {dimension_numbers = #tpu.dot_dimension_numbers<[1], [0], [0], [1], [0, 0, 1, 1], [], []>} : vector<8x32xf32>, vector<32x32xf32>, vector<8x32xf32> -> vector<8x32xf32>
      %c0_42 = arith.constant 0 : index
      %c0_43 = arith.constant 0 : index
      %71 = vector.load %arg13[%c0_42, %c0_43] : memref<8x32xf32, #tpu.memory_space<vmem>>, vector<8x32xf32>
      tpu.vector_store %arg13[%c0_42, %c0_43], %70 {strides = array<i32>} : memref<8x32xf32, #tpu.memory_space<vmem>>, vector<8x32xf32>,
      %c0_44 = arith.constant 0 : index
      %c0_45 = arith.constant 0 : index
      %72 = vector.load %arg7[%c0_44, %c0_45] : memref<32x32xf32, #tpu.memory_space<vmem>>, vector<32x32xf32>
      %cst_46 = arith.constant dense<0.000000e+00> : vector<8x32xf32>
      %73 = tpu.matmul %65, %72, %cst_46 {dimension_numbers = #tpu.dot_dimension_numbers<[1], [0], [0], [1], [0, 0, 1, 1], [], []>} : vector<8x32xf32>, vector<32x32xf32>, vector<8x32xf32> -> vector<8x32xf32>
      %c0_47 = arith.constant 0 : index
      %c0_48 = arith.constant 0 : index
      %74 = vector.load %arg14[%c0_47, %c0_48] : memref<8x32xf32, #tpu.memory_space<vmem>>, vector<8x32xf32>
      tpu.vector_store %arg14[%c0_47, %c0_48], %73 {strides = array<i32>} : memref<8x32xf32, #tpu.memory_space<vmem>>, vector<8x32xf32>,
    } else {
    }
    %c8_i32 = arith.constant 8 : i32
    %3 = arith.muli %arg1, %c8_i32 : i32
    %4 = tpu.assume_multiple %3, 8 : i32
    %5 = arith.index_cast %4 : i32 to index
    %c0 = arith.constant 0 : index
    %6 = vector.load %arg12[%5, %c0] : memref<8x32xf32, #tpu.memory_space<vmem>>, vector<8x32xf32>
    %c0_1 = arith.constant 0 : index
    %c0_2 = arith.constant 0 : index
    %7 = vector.load %arg13[%c0_1, %c0_2] : memref<8x32xf32, #tpu.memory_space<vmem>>, vector<8x32xf32>
    %cst = arith.constant dense<0.000000e+00> : vector<8x8xf32>
    %8 = tpu.matmul %6, %7, %cst {dimension_numbers = #tpu.dot_dimension_numbers<[1], [1], [0], [0], [0, 0, 1, 0], [], []>} : vector<8x32xf32>, vector<8x32xf32>, vector<8x8xf32> -> vector<8x8xf32>
    %cst_3 = arith.constant 0.176776692 : f32
    %9 = vector.broadcast %cst_3 : f32 to vector<8x8xf32>
    %10 = arith.mulf %8, %9 : vector<8x8xf32>
    %c8_i32_4 = arith.constant 8 : i32
    %11 = arith.muli %arg1, %c8_i32_4 : i32
    %12 = tpu.iota {dimensions = array<i32: 0>} : vector<8x8xi32>
    %13 = vector.broadcast %11 : i32 to vector<8x8xi32>
    %14 = arith.addi %13, %12 : vector<8x8xi32>
    %15 = tpu.iota {dimensions = array<i32: 1>} : vector<8x8xi32>
    %16 = arith.cmpi sgt, %15, %14 : vector<8x8xi32>
    %cst_5 = arith.constant -3.40282347E+38 : f32
    %17 = vector.broadcast %cst_5 : f32 to vector<8x8xf32>
    %18 = arith.select %16, %17, %10 : vector<8x8xi1>, vector<8x8xf32>
    %cst_6 = arith.constant dense<0xFF800000> : vector<8xf32>
    %19 = vector.multi_reduction <maximumf>, %18, %cst_6 [1] : vector<8x8xf32> to vector<8xf32>
    %20 = vector.shape_cast %19 : vector<8xf32> to vector<8x1xf32>
    %21 = vector.broadcast %20 : vector<8x1xf32> to vector<8x8xf32>
    %22 = arith.subf %18, %21 : vector<8x8xf32>
    %23 = math.exp %22 : vector<8x8xf32>
    %cst_7 = arith.constant dense<0.000000e+00> : vector<8xf32>
    %24 = vector.multi_reduction <add>, %23, %cst_7 [1] : vector<8x8xf32> to vector<8xf32>
    %25 = vector.shape_cast %24 : vector<8xf32> to vector<8x1xf32>
    %26 = tpu.reciprocal %25 : vector<8x1xf32> -> vector<8x1xf32>
    %27 = vector.broadcast %26 : vector<8x1xf32> to vector<8x8xf32>
    %28 = arith.mulf %23, %27 : vector<8x8xf32>
    %c0_8 = arith.constant 0 : index
    %c0_9 = arith.constant 0 : index
    %c0_10 = arith.constant 0 : index
    %29 = vector.load %arg11[%c0_8, %c0_9, %c0_10] : memref<1x8x8xf32, #tpu.memory_space<vmem>>, vector<1x8x8xf32>
    %30 = vector.shape_cast %29 : vector<1x8x8xf32> to vector<8x8xf32>
    %31 = vector.shape_cast %28 : vector<8x8xf32> to vector<1x8x8xf32>
    tpu.vector_store %arg11[%c0_8, %c0_9, %c0_10], %31 {strides = array<i32>} : memref<1x8x8xf32, #tpu.memory_space<vmem>>, vector<1x8x8xf32>,
    %c0_11 = arith.constant 0 : index
    %c0_12 = arith.constant 0 : index
    %32 = vector.load %arg14[%c0_11, %c0_12] : memref<8x32xf32, #tpu.memory_space<vmem>>, vector<8x32xf32>
    %cst_13 = arith.constant dense<0.000000e+00> : vector<8x32xf32>
    %33 = tpu.matmul %28, %32, %cst_13 {dimension_numbers = #tpu.dot_dimension_numbers<[1], [0], [0], [1], [0, 0, 1, 1], [], []>} : vector<8x8xf32>, vector<8x32xf32>, vector<8x32xf32> -> vector<8x32xf32>
    %c0_14 = arith.constant 0 : index
    %c0_15 = arith.constant 0 : index
    %34 = vector.load %arg8[%c0_14, %c0_15] : memref<32x32xf32, #tpu.memory_space<vmem>>, vector<32x32xf32>
    %cst_16 = arith.constant dense<0.000000e+00> : vector<8x32xf32>
    %35 = tpu.matmul %33, %34, %cst_16 {dimension_numbers = #tpu.dot_dimension_numbers<[1], [0], [0], [1], [0, 0, 1, 1], [], []>} : vector<8x32xf32>, vector<32x32xf32>, vector<8x32xf32> -> vector<8x32xf32>
    %c0_17 = arith.constant 0 : index
    %c0_18 = arith.constant 0 : index
    %36 = vector.load %arg9[%c0_17, %c0_18] : memref<1x32xf32, #tpu.memory_space<vmem>>, vector<1x32xf32>
    %37 = vector.broadcast %36 : vector<1x32xf32> to vector<8x32xf32>
    %38 = arith.addf %35, %37 : vector<8x32xf32>
    %c0_19 = arith.constant 0 : index
    %c0_20 = arith.constant 0 : index
    %c0_21 = arith.constant 0 : index
    %39 = vector.load %arg10[%c0_19, %c0_20, %c0_21] : memref<1x8x32xf32, #tpu.memory_space<vmem>>, vector<1x8x32xf32>
    %40 = vector.shape_cast %39 : vector<1x8x32xf32> to vector<8x32xf32>
    %41 = vector.shape_cast %38 : vector<8x32xf32> to vector<1x8x32xf32>
    tpu.vector_store %arg10[%c0_19, %c0_20, %c0_21], %41 {strides = array<i32>} : memref<1x8x32xf32, #tpu.memory_space<vmem>>, vector<1x8x32xf32>,
    return
  }
  func.func @transform_0(%arg0: i32, %arg1: i32) -> (i32, i32, i32) {
    %c0_i32 = arith.constant 0 : i32
    %c0_i32_0 = arith.constant 0 : i32
    %c0_i32_1 = arith.constant 0 : i32
    return %arg0, %c0_i32, %c0_i32_0 : i32, i32, i32
  }
  func.func @transform_1(%arg0: i32, %arg1: i32) -> (i32, i32) {
    %c0_i32 = arith.constant 0 : i32
    %c0_i32_0 = arith.constant 0 : i32
    %c0_i32_1 = arith.constant 0 : i32
    return %c0_i32, %c0_i32_0 : i32, i32
  }
  func.func @transform_2(%arg0: i32, %arg1: i32) -> (i32, i32) {
    %c0_i32 = arith.constant 0 : i32
    %c0_i32_0 = arith.constant 0 : i32
    %c0_i32_1 = arith.constant 0 : i32
    return %c0_i32, %c0_i32_0 : i32, i32
  }
  func.func @transform_3(%arg0: i32, %arg1: i32) -> (i32, i32) {
    %c0_i32 = arith.constant 0 : i32
    %c0_i32_0 = arith.constant 0 : i32
    %c0_i32_1 = arith.constant 0 : i32
    return %c0_i32, %c0_i32_0 : i32, i32
  }
  func.func @transform_4(%arg0: i32, %arg1: i32) -> (i32, i32) {
    %c0_i32 = arith.constant 0 : i32
    %c0_i32_0 = arith.constant 0 : i32
    %c0_i32_1 = arith.constant 0 : i32
    return %c0_i32, %c0_i32_0 : i32, i32
  }
  func.func @transform_5(%arg0: i32, %arg1: i32) -> (i32, i32) {
    %c0_i32 = arith.constant 0 : i32
    %c0_i32_0 = arith.constant 0 : i32
    %c0_i32_1 = arith.constant 0 : i32
    return %c0_i32, %c0_i32_0 : i32, i32
  }
  func.func @transform_6(%arg0: i32, %arg1: i32) -> (i32, i32) {
    %c0_i32 = arith.constant 0 : i32
    %c0_i32_0 = arith.constant 0 : i32
    %c0_i32_1 = arith.constant 0 : i32
    return %c0_i32, %c0_i32_0 : i32, i32
  }
  func.func @transform_7(%arg0: i32, %arg1: i32) -> (i32, i32) {
    %c0_i32 = arith.constant 0 : i32
    %c0_i32_0 = arith.constant 0 : i32
    %c0_i32_1 = arith.constant 0 : i32
    return %c0_i32, %c0_i32_0 : i32, i32
  }
  func.func @transform_8(%arg0: i32, %arg1: i32) -> (i32, i32, i32) {
    %c0_i32 = arith.constant 0 : i32
    %c0_i32_0 = arith.constant 0 : i32
    return %arg0, %arg1, %c0_i32 : i32, i32, i32
  }
  func.func @transform_9(%arg0: i32, %arg1: i32) -> (i32, i32, i32) {
    %c0_i32 = arith.constant 0 : i32
    %c0_i32_0 = arith.constant 0 : i32
    return %arg0, %arg1, %c0_i32 : i32, i32, i32
  }
}

module attributes {stable_mosaic.version = 11 : i64} {
  func.func @_neural_memory_kernel(%arg0: i32, %arg1: i32, %arg2: memref<1x8x32xf32, #tpu.memory_space<vmem>>, %arg3: memref<1x32xf32, #tpu.memory_space<vmem>>, %arg4: memref<1x32xf32, #tpu.memory_space<vmem>>, %arg5: memref<32x32xf32, #tpu.memory_space<vmem>>, %arg6: memref<32x32xf32, #tpu.memory_space<vmem>>, %arg7: memref<32x32xf32, #tpu.memory_space<vmem>>, %arg8: memref<32x32xf32, #tpu.memory_space<vmem>>, %arg9: memref<1x32xf32, #tpu.memory_space<vmem>>, %arg10: memref<1x8x32xf32, #tpu.memory_space<vmem>>, %arg11: memref<1x8x8xf32, #tpu.memory_space<vmem>>, %arg12: memref<8x32xf32, #tpu.memory_space<vmem>>, %arg13: memref<8x32xf32, #tpu.memory_space<vmem>>, %arg14: memref<8x32xf32, #tpu.memory_space<vmem>>) attributes {dimension_semantics = [#tpu.dimension_semantics<parallel>, #tpu.dimension_semantics<arbitrary>], iteration_bounds = array<i64: 2, 1>, scalar_prefetch = 0 : i64, scratch_operands = 3 : i64, tpu.core_type = #tpu.core_type<tc>, window_params = [{transform_indices = @transform_0, window_bounds = array<i64: 1, 8, 32>}, {pipeline_mode = #tpu.pipeline_mode<synchronous>, transform_indices = @transform_1, window_bounds = array<i64: 1, 32>}, {pipeline_mode = #tpu.pipeline_mode<synchronous>, transform_indices = @transform_2, window_bounds = array<i64: 1, 32>}, {pipeline_mode = #tpu.pipeline_mode<synchronous>, transform_indices = @transform_3, window_bounds = array<i64: 32, 32>}, {pipeline_mode = #tpu.pipeline_mode<synchronous>, transform_indices = @transform_4, window_bounds = array<i64: 32, 32>}, {pipeline_mode = #tpu.pipeline_mode<synchronous>, transform_indices = @transform_5, window_bounds = array<i64: 32, 32>}, {pipeline_mode = #tpu.pipeline_mode<synchronous>, transform_indices = @transform_6, window_bounds = array<i64: 32, 32>}, {pipeline_mode = #tpu.pipeline_mode<synchronous>, transform_indices = @transform_7, window_bounds = array<i64: 1, 32>}, {transform_indices = @transform_8, window_bounds = array<i64: 1, 8, 32>}, {transform_indices = @transform_9, window_bounds = array<i64: 1, 8, 8>}]} {
    %c0_i32 = arith.constant 0 : i32
    %0 = arith.cmpi eq, %arg1, %c0_i32 : i32
    %1 = arith.extui %0 : i1 to i32
    %c0_i32_0 = arith.constant 0 : i32
    %2 = arith.cmpi ne, %1, %c0_i32_0 : i32
    scf.if %2 {
      %c0_22 = arith.constant 0 : index
      %c0_23 = arith.constant 0 : index
      %c0_24 = arith.constant 0 : index
      %42 = vector.load %arg2[%c0_22, %c0_23, %c0_24] : memref<1x8x32xf32, #tpu.memory_space<vmem>>, vector<1x8x32xf32>
      %43 = vector.shape_cast %42 : vector<1x8x32xf32> to vector<8x32xf32>
      %cst_25 = arith.constant dense<0.000000e+00> : vector<8xf32>
      %44 = vector.multi_reduction <add>, %43, %cst_25 [1] : vector<8x32xf32> to vector<8xf32>
      %45 = vector.shape_cast %44 : vector<8xf32> to vector<8x1xf32>
      %cst_26 = arith.constant 3.200000e+01 : f32
      %46 = vector.broadcast %cst_26 : f32 to vector<8x1xf32>
      %47 = arith.divf %45, %46 : vector<8x1xf32>
      %48 = vector.broadcast %47 : vector<8x1xf32> to vector<8x32xf32>
      %49 = arith.subf %43, %48 : vector<8x32xf32>
      %50 = arith.mulf %49, %49 : vector<8x32xf32>
      %cst_27 = arith.constant dense<0.000000e+00> : vector<8xf32>
      %51 = vector.multi_reduction <add>, %50, %cst_27 [1] : vector<8x32xf32> to vector<8xf32>
      %52 = vector.shape_cast %51 : vector<8xf32> to vector<8x1xf32>
      %cst_28 = arith.constant 3.200000e+01 : f32
      %53 = vector.broadcast %cst_28 : f32 to vector<8x1xf32>
      %54 = arith.divf %52, %53 : vector<8x1xf32>
      %cst_29 = arith.constant 9.99999974E-6 : f32
      %55 = vector.broadcast %cst_29 : f32 to vector<8x1xf32>
      %56 = arith.addf %54, %55 : vector<8x1xf32>
      %57 = math.rsqrt %56 : vector<8x1xf32>
      %58 = vector.broadcast %57 : vector<8x1xf32> to vector<8x32xf32>
      %59 = arith.mulf %49, %58 : vector<8x32xf32>
      %c0_30 = arith.constant 0 : index
      %c0_31 = arith.constant 0 : index
      %60 = vector.load %arg3[%c0_30, %c0_31] : memref<1x32xf32, #tpu.memory_space<vmem>>, vector<1x32xf32>
      %61 = vector.broadcast %60 : vector<1x32xf32> to vector<8x32xf32>
      %62 = arith.mulf %59, %61 : vector<8x32xf32>
      %c0_32 = arith.constant 0 : index
      %c0_33 = arith.constant 0 : index
      %63 = vector.load %arg4[%c0_32, %c0_33] : memref<1x32xf32, #tpu.memory_space<vmem>>, vector<1x32xf32>
      %64 = vector.broadcast %63 : vector<1x32xf32> to vector<8x32xf32>
      %65 = arith.addf %62, %64 : vector<8x32xf32>
      %c0_34 = arith.constant 0 : index
      %c0_35 = arith.constant 0 : index
      %66 = vector.load %arg5[%c0_34, %c0_35] : memref<32x32xf32, #tpu.memory_space<vmem>>, vector<32x32xf32>
      %cst_36 = arith.constant dense<0.000000e+00> : vector<8x32xf32>
      %67 = tpu.matmul %65, %66, %cst_36 {dimension_numbers = #tpu.dot_dimension_numbers<[1], [0], [0], [1], [0, 0, 1, 1], [], []>} : vector<8x32xf32>, vector<32x32xf32>, vector<8x32xf32> -> vector<8x32xf32>
      %c0_37 = arith.constant 0 : index
      %c0_38 = arith.constant 0 : index
      %68 = vector.load %arg12[%c0_37, %c0_38] : memref<8x32xf32, #tpu.memory_space<vmem>>, vector<8x32xf32>
      tpu.vector_store %arg12[%c0_37, %c0_38], %67 {strides = array<i32>} : memref<8x32xf32, #tpu.memory_space<vmem>>, vector<8x32xf32>,
      %c0_39 = arith.constant 0 : index
      %c0_40 = arith.constant 0 : index
      %69 = vector.load %arg6[%c0_39, %c0_40] : memref<32x32xf32, #tpu.memory_space<vmem>>, vector<32x32xf32>
      %cst_41 = arith.constant dense<0.000000e+00> : vector<8x32xf32>
      %70 = tpu.matmul %65, %69, %cst_41 {dimension_numbers = #tpu.dot_dimension_numbers<[1], [0], [0], [1], [0, 0, 1, 1], [], []>} : vector<8x32xf32>, vector<32x32xf32>, vector<8x32xf32> -> vector<8x32xf32>
      %c0_42 = arith.constant 0 : index
      %c0_43 = arith.constant 0 : index
      %71 = vector.load %arg13[%c0_42, %c0_43] : memref<8x32xf32, #tpu.memory_space<vmem>>, vector<8x32xf32>
      tpu.vector_store %arg13[%c0_42, %c0_43], %70 {strides = array<i32>} : memref<8x32xf32, #tpu.memory_space<vmem>>, vector<8x32xf32>,
      %c0_44 = arith.constant 0 : index
      %c0_45 = arith.constant 0 : index
      %72 = vector.load %arg7[%c0_44, %c0_45] : memref<32x32xf32, #tpu.memory_space<vmem>>, vector<32x32xf32>
      %cst_46 = arith.constant dense<0.000000e+00> : vector<8x32xf32>
      %73 = tpu.matmul %65, %72, %cst_46 {dimension_numbers = #tpu.dot_dimension_numbers<[1], [0], [0], [1], [0, 0, 1, 1], [], []>} : vector<8x32xf32>, vector<32x32xf32>, vector<8x32xf32> -> vector<8x32xf32>
      %c0_47 = arith.constant 0 : index
      %c0_48 = arith.constant 0 : index
      %74 = vector.load %arg14[%c0_47, %c0_48] : memref<8x32xf32, #tpu.memory_space<vmem>>, vector<8x32xf32>
      tpu.vector_store %arg14[%c0_47, %c0_48], %73 {strides = array<i32>} : memref<8x32xf32, #tpu.memory_space<vmem>>, vector<8x32xf32>,
    } else {
    }
    %c8_i32 = arith.constant 8 : i32
    %3 = arith.muli %arg1, %c8_i32 : i32
    %4 = tpu.assume_multiple %3, 8 : i32
    %5 = arith.index_cast %4 : i32 to index
    %c0 = arith.constant 0 : index
    %6 = vector.load %arg12[%5, %c0] : memref<8x32xf32, #tpu.memory_space<vmem>>, vector<8x32xf32>
    %c0_1 = arith.constant 0 : index
    %c0_2 = arith.constant 0 : index
    %7 = vector.load %arg13[%c0_1, %c0_2] : memref<8x32xf32, #tpu.memory_space<vmem>>, vector<8x32xf32>
    %cst = arith.constant dense<0.000000e+00> : vector<8x8xf32>
    %8 = tpu.matmul %6, %7, %cst {dimension_numbers = #tpu.dot_dimension_numbers<[1], [1], [0], [0], [0, 0, 1, 0], [], []>} : vector<8x32xf32>, vector<8x32xf32>, vector<8x8xf32> -> vector<8x8xf32>
    %cst_3 = arith.constant 0.176776692 : f32
    %9 = vector.broadcast %cst_3 : f32 to vector<8x8xf32>
    %10 = arith.mulf %8, %9 : vector<8x8xf32>
    %c8_i32_4 = arith.constant 8 : i32
    %11 = arith.muli %arg1, %c8_i32_4 : i32
    %12 = tpu.iota {dimensions = array<i32: 0>} : vector<8x8xi32>
    %13 = vector.broadcast %11 : i32 to vector<8x8xi32>
    %14 = arith.addi %13, %12 : vector<8x8xi32>
    %15 = tpu.iota {dimensions = array<i32: 1>} : vector<8x8xi32>
    %16 = arith.cmpi sgt, %15, %14 : vector<8x8xi32>
    %cst_5 = arith.constant -3.40282347E+38 : f32
    %17 = vector.broadcast %cst_5 : f32 to vector<8x8xf32>
    %18 = arith.select %16, %17, %10 : vector<8x8xi1>, vector<8x8xf32>
    %cst_6 = arith.constant dense<0xFF800000> : vector<8xf32>
    %19 = vector.multi_reduction <maximumf>, %18, %cst_6 [1] : vector<8x8xf32> to vector<8xf32>
    %20 = vector.shape_cast %19 : vector<8xf32> to vector<8x1xf32>
    %21 = vector.broadcast %20 : vector<8x1xf32> to vector<8x8xf32>
    %22 = arith.subf %18, %21 : vector<8x8xf32>
    %23 = math.exp %22 : vector<8x8xf32>
    %cst_7 = arith.constant dense<0.000000e+00> : vector<8xf32>
    %24 = vector.multi_reduction <add>, %23, %cst_7 [1] : vector<8x8xf32> to vector<8xf32>
    %25 = vector.shape_cast %24 : vector<8xf32> to vector<8x1xf32>
    %26 = tpu.reciprocal %25 : vector<8x1xf32> -> vector<8x1xf32>
    %27 = vector.broadcast %26 : vector<8x1xf32> to vector<8x8xf32>
    %28 = arith.mulf %23, %27 : vector<8x8xf32>
    %c0_8 = arith.constant 0 : index
    %c0_9 = arith.constant 0 : index
    %c0_10 = arith.constant 0 : index
    %29 = vector.load %arg11[%c0_8, %c0_9, %c0_10] : memref<1x8x8xf32, #tpu.memory_space<vmem>>, vector<1x8x8xf32>
    %30 = vector.shape_cast %29 : vector<1x8x8xf32> to vector<8x8xf32>
    %31 = vector.shape_cast %28 : vector<8x8xf32> to vector<1x8x8xf32>
    tpu.vector_store %arg11[%c0_8, %c0_9, %c0_10], %31 {strides = array<i32>} : memref<1x8x8xf32, #tpu.memory_space<vmem>>, vector<1x8x8xf32>,
    %c0_11 = arith.constant 0 : index
    %c0_12 = arith.constant 0 : index
    %32 = vector.load %arg14[%c0_11, %c0_12] : memref<8x32xf32, #tpu.memory_space<vmem>>, vector<8x32xf32>
    %cst_13 = arith.constant dense<0.000000e+00> : vector<8x32xf32>
    %33 = tpu.matmul %28, %32, %cst_13 {dimension_numbers = #tpu.dot_dimension_numbers<[1], [0], [0], [1], [0, 0, 1, 1], [], []>} : vector<8x8xf32>, vector<8x32xf32>, vector<8x32xf32> -> vector<8x32xf32>
    %c0_14 = arith.constant 0 : index
    %c0_15 = arith.constant 0 : index
    %34 = vector.load %arg8[%c0_14, %c0_15] : memref<32x32xf32, #tpu.memory_space<vmem>>, vector<32x32xf32>
    %cst_16 = arith.constant dense<0.000000e+00> : vector<8x32xf32>
    %35 = tpu.matmul %33, %34, %cst_16 {dimension_numbers = #tpu.dot_dimension_numbers<[1], [0], [0], [1], [0, 0, 1, 1], [], []>} : vector<8x32xf32>, vector<32x32xf32>, vector<8x32xf32> -> vector<8x32xf32>
    %c0_17 = arith.constant 0 : index
    %c0_18 = arith.constant 0 : index
    %36 = vector.load %arg9[%c0_17, %c0_18] : memref<1x32xf32, #tpu.memory_space<vmem>>, vector<1x32xf32>
    %37 = vector.broadcast %36 : vector<1x32xf32> to vector<8x32xf32>
    %38 = arith.addf %35, %37 : vector<8x32xf32>
    %c0_19 = arith.constant 0 : index
    %c0_20 = arith.constant 0 : index
    %c0_21 = arith.constant 0 : index
    %39 = vector.load %arg10[%c0_19, %c0_20, %c0_21] : memref<1x8x32xf32, #tpu.memory_space<vmem>>, vector<1x8x32xf32>
    %40 = vector.shape_cast %39 : vector<1x8x32xf32> to vector<8x32xf32>
    %41 = vector.shape_cast %38 : vector<8x32xf32> to vector<1x8x32xf32>
    tpu.vector_store %arg10[%c0_19, %c0_20, %c0_21], %41 {strides = array<i32>} : memref<1x8x32xf32, #tpu.memory_space<vmem>>, vector<1x8x32xf32>,
    return
  }
  func.func @transform_0(%arg0: i32, %arg1: i32) -> (i32, i32, i32) {
    %c0_i32 = arith.constant 0 : i32
    %c0_i32_0 = arith.constant 0 : i32
    %c0_i32_1 = arith.constant 0 : i32
    return %arg0, %c0_i32, %c0_i32_0 : i32, i32, i32
  }
  func.func @transform_1(%arg0: i32, %arg1: i32) -> (i32, i32) {
    %c0_i32 = arith.constant 0 : i32
    %c0_i32_0 = arith.constant 0 : i32
    %c0_i32_1 = arith.constant 0 : i32
    return %c0_i32, %c0_i32_0 : i32, i32
  }
  func.func @transform_2(%arg0: i32, %arg1: i32) -> (i32, i32) {
    %c0_i32 = arith.constant 0 : i32
    %c0_i32_0 = arith.constant 0 : i32
    %c0_i32_1 = arith.constant 0 : i32
    return %c0_i32, %c0_i32_0 : i32, i32
  }
  func.func @transform_3(%arg0: i32, %arg1: i32) -> (i32, i32) {
    %c0_i32 = arith.constant 0 : i32
    %c0_i32_0 = arith.constant 0 : i32
    %c0_i32_1 = arith.constant 0 : i32
    return %c0_i32, %c0_i32_0 : i32, i32
  }
  func.func @transform_4(%arg0: i32, %arg1: i32) -> (i32, i32) {
    %c0_i32 = arith.constant 0 : i32
    %c0_i32_0 = arith.constant 0 : i32
    %c0_i32_1 = arith.constant 0 : i32
    return %c0_i32, %c0_i32_0 : i32, i32
  }
  func.func @transform_5(%arg0: i32, %arg1: i32) -> (i32, i32) {
    %c0_i32 = arith.constant 0 : i32
    %c0_i32_0 = arith.constant 0 : i32
    %c0_i32_1 = arith.constant 0 : i32
    return %c0_i32, %c0_i32_0 : i32, i32
  }
  func.func @transform_6(%arg0: i32, %arg1: i32) -> (i32, i32) {
    %c0_i32 = arith.constant 0 : i32
    %c0_i32_0 = arith.constant 0 : i32
    %c0_i32_1 = arith.constant 0 : i32
    return %c0_i32, %c0_i32_0 : i32, i32
  }
  func.func @transform_7(%arg0: i32, %arg1: i32) -> (i32, i32) {
    %c0_i32 = arith.constant 0 : i32
    %c0_i32_0 = arith.constant 0 : i32
    %c0_i32_1 = arith.constant 0 : i32
    return %c0_i32, %c0_i32_0 : i32, i32
  }
  func.func @transform_8(%arg0: i32, %arg1: i32) -> (i32, i32, i32) {
    %c0_i32 = arith.constant 0 : i32
    %c0_i32_0 = arith.constant 0 : i32
    return %arg0, %arg1, %c0_i32 : i32, i32, i32
  }
  func.func @transform_9(%arg0: i32, %arg1: i32) -> (i32, i32, i32) {
    %c0_i32 = arith.constant 0 : i32
    %c0_i32_0 = arith.constant 0 : i32
    return %arg0, %arg1, %c0_i32 : i32, i32, i32
  }
}

</mosaic_0001>

<llo_original>
// kernel: tpu_custom_call.1
$region0: #{tpu_custom_call.1}
  #allocation0 [shape = 'u32[]', space=smem, size = 0x4, offset = 0x4, fixed_abs, tag = 'smem constant byte address 0x4 - core index']
  #allocation1 [shape = 'u32[144,128]{1,0:T(1,128)}', space=vmem, size = 0x12000, scoped, tag = 'internal scratch']
  #allocation2 [shape = 'f32[8,32]{1,0:T(8,128)}', space=vmem, size = 0x1000, scoped, tag = 'scratch operand']
  #allocation3 [shape = 'f32[8,32]{1,0:T(8,128)}', space=vmem, size = 0x1000, scoped, tag = 'scratch operand']
  #allocation4 [shape = 'f32[8,32]{1,0:T(8,128)}', space=vmem, size = 0x1000, scoped, tag = 'scratch operand']
  %s0 = inlined_call_operand.hbm [shape: f32[2,8,32], index: 0, kind: input, shape index: {}]
  %s1 = inlined_call_operand.vmem [shape: f32[1,32], index: 1, kind: input, shape index: {}]
  %s2 = inlined_call_operand.vmem [shape: f32[1,32], index: 2, kind: input, shape index: {}]
  %s3 = inlined_call_operand.hbm [shape: f32[32,32], index: 3, kind: input, shape index: {}]
  %s4 = inlined_call_operand.hbm [shape: f32[32,32], index: 4, kind: input, shape index: {}]
  %s5 = inlined_call_operand.hbm [shape: f32[32,32], index: 5, kind: input, shape index: {}]
  %s6 = inlined_call_operand.hbm [shape: f32[32,32], index: 6, kind: input, shape index: {}]
  %s7 = inlined_call_operand.vmem [shape: f32[1,32], index: 7, kind: input, shape index: {}]
  %s8 = inlined_call_operand.hbm [shape: f32[2,8,32], index: 8, kind: output, shape index: {0}]
  %s9 = inlined_call_operand.hbm [shape: f32[2,8,8], index: 9, kind: output, shape index: {1}]
  %10 = xla_tuple %s8, %s9
  %s11 = sld [smem:[#allocation0]]
  $region97: #{tpu_custom_call.1} parent=0
    _
  %s13 = ssub.s32 1, %s11
  %s14 = scalar_select 0, %s13, %s11
  $region1: #{tpu_custom_call.1} parent=0
    #allocation5 [shape = 'u8[4096]{0}', space=vmem, size = 0x1000, scoped, tag = 'input window, operand 0, single buffered']
    #allocation6 [shape = 's32[2]{0}', space=sflag, size = 0x8, scoped, tag = 'scoped memory for tpu_custom_call.1']
    #allocation7 [shape = 's32[2]{0}', space=sflag, size = 0x8, scoped, tag = 'scoped memory for tpu_custom_call.1']
    #allocation8 [shape = 'u8[16384]{0}', space=vmem, size = 0x4000, scoped, tag = 'input window, operand 3, single buffered']
    #allocation9 [shape = 's32[1]{0}', space=sflag, size = 0x4, scoped, tag = 'scoped memory for tpu_custom_call.1']
    #allocation10 [shape = 'u8[16384]{0}', space=vmem, size = 0x4000, scoped, tag = 'input window, operand 4, single buffered']
    #allocation11 [shape = 'u8[16384]{0}', space=vmem, size = 0x4000, scoped, tag = 'input window, operand 5, single buffered']
    #allocation12 [shape = 's32[1]{0}', space=sflag, size = 0x4, scoped, tag = 'scoped memory for tpu_custom_call.1']
    #allocation13 [shape = 'u8[16384]{0}', space=vmem, size = 0x4000, scoped, tag = 'input window, operand 6, single buffered']
    #allocation14 [shape = 'u8[8192]{0}', space=vmem, size = 0x2000, scoped, tag = 'output window, operand 0']
    #allocation15 [shape = 'u8[8192]{0}', space=vmem, size = 0x2000, scoped, tag = 'output window, operand 1']
    #allocation16 [shape = 's32[2]{0}', space=sflag, size = 0x8, scoped, tag = 'scoped memory for tpu_custom_call.1']
    %15 = vsyncpa [#allocation6], 0
    %16 = vsyncpa [#allocation9], 0
    %17 = vsyncpa [#allocation12], 0
    %18 = vsyncpa [#allocation7], 0
    %s19 = scalar_lea.sflag [#allocation7], 1
    %20 = vsyncpa %s19, 0
    %21 = vsyncpa [#allocation16], 0
    %s22 = scalar_lea.sflag [#allocation16], 1
    %23 = vsyncpa %s22, 0
    loop: start=0, step=1, limit=4
    $region2: #{tpu_custom_call.1} parent=1 // loop_pre_header
      _
    $region3: #{tpu_custom_call.1} parent=1 // loop_header
      %s25 = sphi 0, %s29
      %p26 = scmp.ge.s32.totalorder %s25, 4
      %s32 = sphi 0, %s44
      %s33 = sphi 0, %s40
      %s34 = sphi 0, %s32
      %s35 = sphi 0, %s33
      %s36 = sphi 0, %s34
      %s37 = sphi 0, %s35
      %s47 = sphi 0, %s49
      %s50 = sphi 0, %s47
      %s51 = sphi 0, %s50
      %s67 = sphi 0, %s51
      %s71 = sphi 0, %s71
      %s73 = sphi 0, %s71
      %s74 = sphi 0, %s73
      %s88 = sphi 0, %s74
      %s92 = sphi 0, %s92
      %s94 = sphi 0, %s92
      %s95 = sphi 0, %s94
      %s109 = sphi 0, %s95
      %s113 = sphi 0, %s113
      %s115 = sphi 0, %s113
      %s116 = sphi 0, %s115
      %s130 = sphi 0, %s116
      %s134 = sphi 0, %s134
      %s136 = sphi 0, %s134
      %s137 = sphi 0, %s136
      %s151 = sphi 0, %s137
      %s155 = sphi 0, %s155
      %s157 = sphi 0, %s155
      %s158 = sphi 0, %s157
      %s172 = sphi 0, %s158
      %s176 = sphi 0, %s176
      %s178 = sphi 0, %s176
      %s179 = sphi 0, %s178
      %s193 = sphi 0, %s179
      %s197 = sphi 0, %s197
      %s199 = sphi 0, %s197
      %s200 = sphi 0, %s199
      %s214 = sphi 0, %s200
      %s222 = sphi 0, %s224
      %s225 = sphi 0, %s222
      %s226 = sphi 0, %s225
      %s242 = sphi 0, %s226
      %s250 = sphi 0, %s252
      %s253 = sphi 0, %s250
      %s254 = sphi 0, %s253
      %s270 = sphi 0, %s254
    $region4: #{tpu_custom_call.1} parent=1 // loop_header_branch
      %28 = sbr.rel (%p26) target = $region8
    $region5: #{tpu_custom_call.1} parent=1 // loop_body
      %s30 = ssub.s32 %s25, 1
      %s31 = ssub.s32 %s25, 2
      %s38 = sadd.s32 1, %s33
      %p39 = scmp.ge.s32.totalorder %s38, 1
      %s40 = scalar_select %p39, 0, %s38
      %s41 = sadd.s32 1, %s32
      %s42 = scalar_select %p39, %s41, %s32
      %p43 = scmp.ge.s32.totalorder %s42, 2
      %s44 = scalar_select %p43, 0, %s42
      %s45 = ssub.s32 %s32, %s44
      %p46 = scmp.eq.s32.totalorder %s45, 0
      %s48 = sadd.s32 %s47, 1
      %s49 = scalar_select %p46, %s47, %s48
      %p52 = pneg %p46
      %p53 = scmp.eq.s32.totalorder %s25, 1
      %p54 = por %p52, %p53
      %p55 = scmp.ne.s32.totalorder %s47, %s50
      %p56 = scmp.eq.s32.totalorder %s25, 0
      %p57 = por %p55, %p56
      %p58 = scmp.ne.s32.totalorder %s47, %s50
      %p59 = scmp.eq.s32.totalorder %s30, 1
      %p60 = por %p58, %p59
      %p61 = scmp.ne.s32.totalorder %s50, %s51
      %p62 = scmp.eq.s32.totalorder %s30, 0
      %p63 = por %p61, %p62
      %p64 = scmp.ne.s32.totalorder %s50, %s51
      %p65 = scmp.eq.s32.totalorder %s31, 1
      %p66 = por %p64, %p65
      %p68 = scmp.ne.s32.totalorder %s51, %s67
      %p69 = scmp.eq.s32.totalorder %s31, 0
      %p70 = por %p68, %p69
      %s72 = sadd.s32 %s71, 1
      %p75 = scmp.eq.s32.totalorder %s25, 1
      %p76 = scmp.ne.s32.totalorder %s71, %s73
      %p77 = scmp.eq.s32.totalorder %s25, 0
      %p78 = por %p76, %p77
      %p79 = scmp.ne.s32.totalorder %s71, %s73
      %p80 = scmp.eq.s32.totalorder %s30, 1
      %p81 = por %p79, %p80
      %p82 = scmp.ne.s32.totalorder %s73, %s74
      %p83 = scmp.eq.s32.totalorder %s30, 0
      %p84 = por %p82, %p83
      %p85 = scmp.ne.s32.totalorder %s73, %s74
      %p86 = scmp.eq.s32.totalorder %s31, 1
      %p87 = por %p85, %p86
      %p89 = scmp.ne.s32.totalorder %s74, %s88
      %p90 = scmp.eq.s32.totalorder %s31, 0
      %p91 = por %p89, %p90
      %s93 = sadd.s32 %s92, 1
      %p96 = scmp.eq.s32.totalorder %s25, 1
      %p97 = scmp.ne.s32.totalorder %s92, %s94
      %p98 = scmp.eq.s32.totalorder %s25, 0
      %p99 = por %p97, %p98
      %p100 = scmp.ne.s32.totalorder %s92, %s94
      %p101 = scmp.eq.s32.totalorder %s30, 1
      %p102 = por %p100, %p101
      %p103 = scmp.ne.s32.totalorder %s94, %s95
      %p104 = scmp.eq.s32.totalorder %s30, 0
      %p105 = por %p103, %p104
      %p106 = scmp.ne.s32.totalorder %s94, %s95
      %p107 = scmp.eq.s32.totalorder %s31, 1
      %p108 = por %p106, %p107
      %p110 = scmp.ne.s32.totalorder %s95, %s109
      %p111 = scmp.eq.s32.totalorder %s31, 0
      %p112 = por %p110, %p111
      %s114 = sadd.s32 %s113, 1
      %p117 = scmp.eq.s32.totalorder %s25, 1
      %p118 = scmp.ne.s32.totalorder %s113, %s115
      %p119 = scmp.eq.s32.totalorder %s25, 0
      %p120 = por %p118, %p119
      %p121 = scmp.ne.s32.totalorder %s113, %s115
      %p122 = scmp.eq.s32.totalorder %s30, 1
      %p123 = por %p121, %p122
      %p124 = scmp.ne.s32.totalorder %s115, %s116
      %p125 = scmp.eq.s32.totalorder %s30, 0
      %p126 = por %p124, %p125
      %p127 = scmp.ne.s32.totalorder %s115, %s116
      %p128 = scmp.eq.s32.totalorder %s31, 1
      %p129 = por %p127, %p128
      %p131 = scmp.ne.s32.totalorder %s116, %s130
      %p132 = scmp.eq.s32.totalorder %s31, 0
      %p133 = por %p131, %p132
      %s135 = sadd.s32 %s134, 1
      %p138 = scmp.eq.s32.totalorder %s25, 1
      %p139 = scmp.ne.s32.totalorder %s134, %s136
      %p140 = scmp.eq.s32.totalorder %s25, 0
      %p141 = por %p139, %p140
      %p142 = scmp.ne.s32.totalorder %s134, %s136
      %p143 = scmp.eq.s32.totalorder %s30, 1
      %p144 = por %p142, %p143
      %p145 = scmp.ne.s32.totalorder %s136, %s137
      %p146 = scmp.eq.s32.totalorder %s30, 0
      %p147 = por %p145, %p146
      %p148 = scmp.ne.s32.totalorder %s136, %s137
      %p149 = scmp.eq.s32.totalorder %s31, 1
      %p150 = por %p148, %p149
      %p152 = scmp.ne.s32.totalorder %s137, %s151
      %p153 = scmp.eq.s32.totalorder %s31, 0
      %p154 = por %p152, %p153
      %s156 = sadd.s32 %s155, 1
      %p159 = scmp.eq.s32.totalorder %s25, 1
      %p160 = scmp.ne.s32.totalorder %s155, %s157
      %p161 = scmp.eq.s32.totalorder %s25, 0
      %p162 = por %p160, %p161
      %p163 = scmp.ne.s32.totalorder %s155, %s157
      %p164 = scmp.eq.s32.totalorder %s30, 1
      %p165 = por %p163, %p164
      %p166 = scmp.ne.s32.totalorder %s157, %s158
      %p167 = scmp.eq.s32.totalorder %s30, 0
      %p168 = por %p166, %p167
      %p169 = scmp.ne.s32.totalorder %s157, %s158
      %p170 = scmp.eq.s32.totalorder %s31, 1
      %p171 = por %p169, %p170
      %p173 = scmp.ne.s32.totalorder %s158, %s172
      %p174 = scmp.eq.s32.totalorder %s31, 0
      %p175 = por %p173, %p174
      %s177 = sadd.s32 %s176, 1
      %p180 = scmp.eq.s32.totalorder %s25, 1
      %p181 = scmp.ne.s32.totalorder %s176, %s178
      %p182 = scmp.eq.s32.totalorder %s25, 0
      %p183 = por %p181, %p182
      %p184 = scmp.ne.s32.totalorder %s176, %s178
      %p185 = scmp.eq.s32.totalorder %s30, 1
      %p186 = por %p184, %p185
      %p187 = scmp.ne.s32.totalorder %s178, %s179
      %p188 = scmp.eq.s32.totalorder %s30, 0
      %p189 = por %p187, %p188
      %p190 = scmp.ne.s32.totalorder %s178, %s179
      %p191 = scmp.eq.s32.totalorder %s31, 1
      %p192 = por %p190, %p191
      %p194 = scmp.ne.s32.totalorder %s179, %s193
      %p195 = scmp.eq.s32.totalorder %s31, 0
      %p196 = por %p194, %p195
      %s198 = sadd.s32 %s197, 1
      %p201 = scmp.eq.s32.totalorder %s25, 1
      %p202 = scmp.ne.s32.totalorder %s197, %s199
      %p203 = scmp.eq.s32.totalorder %s25, 0
      %p204 = por %p202, %p203
      %p205 = scmp.ne.s32.totalorder %s197, %s199
      %p206 = scmp.eq.s32.totalorder %s30, 1
      %p207 = por %p205, %p206
      %p208 = scmp.ne.s32.totalorder %s199, %s200
      %p209 = scmp.eq.s32.totalorder %s30, 0
      %p210 = por %p208, %p209
      %p211 = scmp.ne.s32.totalorder %s199, %s200
      %p212 = scmp.eq.s32.totalorder %s31, 1
      %p213 = por %p211, %p212
      %p215 = scmp.ne.s32.totalorder %s200, %s214
      %p216 = scmp.eq.s32.totalorder %s31, 0
      %p217 = por %p215, %p216
      %s218 = ssub.s32 %s32, %s44
      %s219 = ssub.s32 %s33, %s40
      %s220 = sor.u32 %s218, %s219
      %p221 = scmp.eq.s32.totalorder %s220, 0
      %s223 = sadd.s32 %s222, 1
      %s224 = scalar_select %p221, %s222, %s223
      %p227 = pneg %p221
      %p228 = scmp.eq.s32.totalorder %s25, 1
      %p229 = por %p227, %p228
      %p230 = scmp.ne.s32.totalorder %s222, %s225
      %p231 = scmp.eq.s32.totalorder %s25, 0
      %p232 = por %p230, %p231
      %p233 = scmp.ne.s32.totalorder %s222, %s225
      %p234 = scmp.eq.s32.totalorder %s30, 1
      %p235 = por %p233, %p234
      %p236 = scmp.ne.s32.totalorder %s225, %s226
      %p237 = scmp.eq.s32.totalorder %s30, 0
      %p238 = por %p236, %p237
      %p239 = scmp.ne.s32.totalorder %s225, %s226
      %p240 = scmp.eq.s32.totalorder %s31, 1
      %p241 = por %p239, %p240
      %p243 = scmp.ne.s32.totalorder %s226, %s242
      %p244 = scmp.eq.s32.totalorder %s31, 0
      %p245 = por %p243, %p244
      %s246 = ssub.s32 %s32, %s44
      %s247 = ssub.s32 %s33, %s40
      %s248 = sor.u32 %s246, %s247
      %p249 = scmp.eq.s32.totalorder %s248, 0
      %s251 = sadd.s32 %s250, 1
      %s252 = scalar_select %p249, %s250, %s251
      %p255 = pneg %p249
      %p256 = scmp.eq.s32.totalorder %s25, 1
      %p257 = por %p255, %p256
      %p258 = scmp.ne.s32.totalorder %s250, %s253
      %p259 = scmp.eq.s32.totalorder %s25, 0
      %p260 = por %p258, %p259
      %p261 = scmp.ne.s32.totalorder %s250, %s253
      %p262 = scmp.eq.s32.totalorder %s30, 1
      %p263 = por %p261, %p262
      %p264 = scmp.ne.s32.totalorder %s253, %s254
      %p265 = scmp.eq.s32.totalorder %s30, 0
      %p266 = por %p264, %p265
      %p267 = scmp.ne.s32.totalorder %s253, %s254
      %p268 = scmp.eq.s32.totalorder %s31, 1
      %p269 = por %p267, %p268
      %p271 = scmp.ne.s32.totalorder %s254, %s270
      %p272 = scmp.eq.s32.totalorder %s31, 0
      %p273 = por %p271, %p272
      %p274 = scmp.le.s32.totalorder 1, %s25
      %p275 = scmp.lt.s32.totalorder %s25, 3
      %p276 = pnand %p274, %p275
      %p277 = pneg %p276
      // Predicated region
      $region9: #{tpu_custom_call.1} parent=5 // pred_check
        _
      $region10: #{tpu_custom_call.1} parent=5 // pred_check_branch
        %279 = sbr.rel (%p276) target = $region12
      $region11: #{tpu_custom_call.1} parent=5 // pred_region
        %s280 = ssub.s32 %s25, 1
        // Predicated region
        $region13: #{tpu_custom_call.1} parent=11 // pred_check
          %p281 = pneg %p63
        $region14: #{tpu_custom_call.1} parent=11 // pred_check_branch
          %283 = sbr.rel (%p281) target = $region16
        $region15: #{tpu_custom_call.1} parent=11 // pred_region
          %s285 = ssub.s32 128, 128
          %286 = vsyncadd [#allocation6], %s285
          %s287 = smul.addr %s34, 128
          %s288 = scalar_lea.hbm %s0, %s287
          %s290 = sshll.u32 [#allocation5], 4
          %s291 = int_to_ptr.vmem [resolvable:$true] %s290
          %293 = dma.hbm_to_vmem [thread:$0]  %s288, 128, %s291, [#allocation6]
        $region16: #{tpu_custom_call.1} parent=11 // pred_fallthru
          _
        // Predicated region
        $region17: #{tpu_custom_call.1} parent=11 // pred_check
          %p294 = pneg %p84
        $region18: #{tpu_custom_call.1} parent=11 // pred_check_branch
          %296 = sbr.rel (%p294) target = $region20
        $region19: #{tpu_custom_call.1} parent=11 // pred_region
          _
        $region20: #{tpu_custom_call.1} parent=11 // pred_fallthru
          _
        // Predicated region
        $region21: #{tpu_custom_call.1} parent=11 // pred_check
          %p297 = pneg %p105
        $region22: #{tpu_custom_call.1} parent=11 // pred_check_branch
          %299 = sbr.rel (%p297) target = $region24
        $region23: #{tpu_custom_call.1} parent=11 // pred_region
          _
        $region24: #{tpu_custom_call.1} parent=11 // pred_fallthru
          _
        // Predicated region
        $region25: #{tpu_custom_call.1} parent=11 // pred_check
          %p300 = pneg %p126
        $region26: #{tpu_custom_call.1} parent=11 // pred_check_branch
          %302 = sbr.rel (%p300) target = $region28
        $region27: #{tpu_custom_call.1} parent=11 // pred_region
          %s304 = ssub.s32 512, 512
          %305 = vsyncadd [#allocation9], %s304
          %s306 = sshll.u32 [#allocation8], 4
          %s307 = int_to_ptr.vmem [resolvable:$true] %s306
          %312 = dma.hbm_to_vmem [thread:$0]  %s3, 512, %s307, [#allocation9], 128, 128, 8
        $region28: #{tpu_custom_call.1} parent=11 // pred_fallthru
          _
        // Predicated region
        $region29: #{tpu_custom_call.1} parent=11 // pred_check
          %p313 = pneg %p147
        $region30: #{tpu_custom_call.1} parent=11 // pred_check_branch
          %315 = sbr.rel (%p313) target = $region32
        $region31: #{tpu_custom_call.1} parent=11 // pred_region
          %s317 = ssub.s32 512, 512
          %318 = vsyncadd [#allocation9], %s317
          %s319 = sshll.u32 [#allocation10], 4
          %s320 = int_to_ptr.vmem [resolvable:$true] %s319
          %325 = dma.hbm_to_vmem [thread:$0]  %s4, 512, %s320, [#allocation9], 128, 128, 8
        $region32: #{tpu_custom_call.1} parent=11 // pred_fallthru
          _
        // Predicated region
        $region33: #{tpu_custom_call.1} parent=11 // pred_check
          %p326 = pneg %p168
        $region34: #{tpu_custom_call.1} parent=11 // pred_check_branch
          %328 = sbr.rel (%p326) target = $region36
        $region35: #{tpu_custom_call.1} parent=11 // pred_region
          %s330 = ssub.s32 512, 512
          %331 = vsyncadd [#allocation12], %s330
          %s332 = sshll.u32 [#allocation11], 4
          %s333 = int_to_ptr.vmem [resolvable:$true] %s332
          %338 = dma.hbm_to_vmem [thread:$0]  %s5, 512, %s333, [#allocation12], 128, 128, 8
        $region36: #{tpu_custom_call.1} parent=11 // pred_fallthru
          _
        // Predicated region
        $region37: #{tpu_custom_call.1} parent=11 // pred_check
          %p339 = pneg %p189
        $region38: #{tpu_custom_call.1} parent=11 // pred_check_branch
          %341 = sbr.rel (%p339) target = $region40
        $region39: #{tpu_custom_call.1} parent=11 // pred_region
          %s343 = ssub.s32 512, 512
          %344 = vsyncadd [#allocation12], %s343
          %s345 = sshll.u32 [#allocation13], 4
          %s346 = int_to_ptr.vmem [resolvable:$true] %s345
          %351 = dma.hbm_to_vmem [thread:$0]  %s6, 512, %s346, [#allocation12], 128, 128, 8
        $region40: #{tpu_custom_call.1} parent=11 // pred_fallthru
          _
        // Predicated region
        $region41: #{tpu_custom_call.1} parent=11 // pred_check
          %p352 = pneg %p210
        $region42: #{tpu_custom_call.1} parent=11 // pred_check_branch
          %354 = sbr.rel (%p352) target = $region44
        $region43: #{tpu_custom_call.1} parent=11 // pred_region
          _
        $region44: #{tpu_custom_call.1} parent=11 // pred_fallthru
          _
      $region12: #{tpu_custom_call.1} parent=5 // pred_fallthru
        _
      %p355 = scmp.lt.s32.totalorder %s25, 2
      // Predicated region
      $region45: #{tpu_custom_call.1} parent=5 // pred_check
        %p356 = pneg %p355
      $region46: #{tpu_custom_call.1} parent=5 // pred_check_branch
        %358 = sbr.rel (%p356) target = $region48
      $region47: #{tpu_custom_call.1} parent=5 // pred_region
        _
      $region48: #{tpu_custom_call.1} parent=5 // pred_fallthru
        _
      %p359 = scmp.le.s32.totalorder 1, %s25
      %p360 = scmp.lt.s32.totalorder %s25, 3
      %p361 = pnand %p359, %p360
      %p362 = pneg %p361
      // Predicated region
      $region49: #{tpu_custom_call.1} parent=5 // pred_check
        _
      $region50: #{tpu_custom_call.1} parent=5 // pred_check_branch
        %364 = sbr.rel (%p361) target = $region52
      $region51: #{tpu_custom_call.1} parent=5 // pred_region
        %s365 = ssub.s32 %s25, 1
        // Predicated region
        $region53: #{tpu_custom_call.1} parent=51 // pred_check
          %p366 = pneg %p63
        $region54: #{tpu_custom_call.1} parent=51 // pred_check_branch
          %368 = sbr.rel (%p366) target = $region56
        $region55: #{tpu_custom_call.1} parent=51 // pred_region
          %369 = dma.done [#allocation6], 128
        $region56: #{tpu_custom_call.1} parent=51 // pred_fallthru
          _
        // Predicated region
        $region57: #{tpu_custom_call.1} parent=51 // pred_check
          %p370 = pneg %p126
        $region58: #{tpu_custom_call.1} parent=51 // pred_check_branch
          %372 = sbr.rel (%p370) target = $region60
        $region59: #{tpu_custom_call.1} parent=51 // pred_region
          %373 = dma.done [#allocation9], 512
        $region60: #{tpu_custom_call.1} parent=51 // pred_fallthru
          _
        // Predicated region
        $region61: #{tpu_custom_call.1} parent=51 // pred_check
          %p374 = pneg %p147
        $region62: #{tpu_custom_call.1} parent=51 // pred_check_branch
          %376 = sbr.rel (%p374) target = $region64
        $region63: #{tpu_custom_call.1} parent=51 // pred_region
          %377 = dma.done [#allocation9], 512
        $region64: #{tpu_custom_call.1} parent=51 // pred_fallthru
          _
        // Predicated region
        $region65: #{tpu_custom_call.1} parent=51 // pred_check
          %p378 = pneg %p168
        $region66: #{tpu_custom_call.1} parent=51 // pred_check_branch
          %380 = sbr.rel (%p378) target = $region68
        $region67: #{tpu_custom_call.1} parent=51 // pred_region
          %381 = dma.done [#allocation12], 512
        $region68: #{tpu_custom_call.1} parent=51 // pred_fallthru
          _
        // Predicated region
        $region69: #{tpu_custom_call.1} parent=51 // pred_check
          %p382 = pneg %p189
        $region70: #{tpu_custom_call.1} parent=51 // pred_check_branch
          %384 = sbr.rel (%p382) target = $region72
        $region71: #{tpu_custom_call.1} parent=51 // pred_region
          %385 = dma.done [#allocation12], 512
        $region72: #{tpu_custom_call.1} parent=51 // pred_fallthru
          _
        %p386 = pneg %p63
        %p387 = pneg %p60
        %p388 = pneg %p84
        %p389 = pneg %p81
        %p390 = pneg %p105
        %p391 = pneg %p102
        %p392 = pneg %p126
        %p393 = pneg %p123
        %p394 = pneg %p147
        %p395 = pneg %p144
        %p396 = pneg %p168
        %p397 = pneg %p165
        %p398 = pneg %p189
        %p399 = pneg %p186
        %p400 = pneg %p210
        %p401 = pneg %p207
        %p402 = pneg %p238
        %p403 = pneg %p235
        %s404 = sand.u32 %s225, 1
        %s405 = scalar_lea.sflag [#allocation7], %s404
        %s406 = sand.u32 %s225, 1
        %s407 = smul.addr %s406, 8
        %s408 = scalar_lea.vmem [#allocation14], %s407
        %p409 = pneg %p266
        %p410 = pneg %p263
        %s411 = sand.u32 %s253, 1
        %s412 = scalar_lea.sflag [#allocation16], %s411
        %s413 = sand.u32 %s253, 1
        %s414 = smul.addr %s413, 8
        %s415 = scalar_lea.vmem [#allocation15], %s414
        %p416 = scmp.eq.s32.totalorder %s35, 0
        // Predicated region
        $region73: #{tpu_custom_call.1} parent=51 // pred_check
          %p417 = pneg %p416
        $region74: #{tpu_custom_call.1} parent=51 // pred_check_branch
          %419 = sbr.rel (%p417) target = $region76
        $region75: #{tpu_custom_call.1} parent=51 // pred_region
          %v420 = vld [vmem:[#allocation5] sm:$0xff]
          %vm421 = vcmask 261120
          %v422 = vsel %vm421, %v420, 0.0
          %423 = vadd.xlane.f32.xlu0 %v422
          %v424 = vpop.xlane.xlu0 %423
          %v425 = vrcp.pop 32.0
          %v426 = vmul.f32 %v424, %v425
          %v427 = vsub.f32 %v420, %v426
          %v428 = vmul.f32 %v427, %v427
          %v429 = vsel %vm421, %v428, 0.0
          %430 = vadd.xlane.f32.xlu0 %v429
          %v431 = vpop.xlane.xlu0 %430
          %v432 = vmul.f32 %v431, %v425
          %v433 = vadd.f32 %v432, 1e-05
          %v434 = vrsqrt.pop %v433
          %v435 = vmul.f32 %v427, %v434
          %v436 = vld [vmem:[%s1] sm:$0x1]
          %v438 = vlaneseq
          %v439 = vshrl.u32 %v438, 7
          %v440 = vsub.s32 0, %v439
          %v441 = vrot.slane %v436, %v440
          %v443 = vmul.f32 %v435, %v441
          %v444 = vld [vmem:[%s2] sm:$0x1]
          %v446 = vlaneseq
          %v447 = vshrl.u32 %v446, 7
          %v448 = vsub.s32 0, %v447
          %v449 = vrot.slane %v444, %v448
          %v451 = vadd.f32 %v443, %v449
          %v452 = vld [vmem:[#allocation8] sm:$0xff]
          %v453 = vld [vmem:[#allocation8 + $0x8] sm:$0xff]
          %v454 = vld [vmem:[#allocation8 + $0x10] sm:$0xff]
          %v455 = vld [vmem:[#allocation8 + $0x18] sm:$0xff]
          %v457 = vsel %vm421, %v451, 0
          %459 = vmatprep.subr.mxu0 0.0
          %460 = vmatpush1.msra.mxu0 0.0
          %461 = vmatprep.subr.mxu0 0.0
          %462 = vmatpush1.msra.mxu0 0.0
          %463 = vmatprep.subr.mxu0 0.0
          %464 = vmatpush1.msra.mxu0 0.0
          %465 = vmatprep.subr.mxu0 0.0
          %466 = vmatpush1.msra.mxu0 0.0
          %467 = vmatprep.subr.mxu0 0.0
          %468 = vmatpush1.msra.mxu0 0.0
          %469 = vmatprep.subr.mxu0 0.0
          %470 = vmatpush1.msra.mxu0 0.0
          %471 = vmatprep.subr.mxu0 0.0
          %472 = vmatpush1.msra.mxu0 0.0
          %473 = vmatprep.subr.mxu0 0.0
          %474 = vmatpush1.msra.mxu0 0.0
          %475 = vmatprep.subr.mxu0 0.0
          %476 = vmatpush1.msra.mxu0 0.0
          %477 = vmatprep.subr.mxu0 0.0
          %478 = vmatpush1.msra.mxu0 0.0
          %479 = vmatprep.subr.mxu0 0.0
          %480 = vmatpush1.msra.mxu0 0.0
          %481 = vmatprep.subr.mxu0 0.0
          %482 = vmatpush1.msra.mxu0 0.0
          %483 = vmatprep.subr.mxu0 0.0
          %484 = vmatpush1.msra.mxu0 %v455
          %485 = vmatprep.subr.mxu0 0.0
          %486 = vmatpush1.msra.mxu0 %v454
          %487 = vmatprep.subr.mxu0 0.0
          %488 = vmatpush1.msra.mxu0 %v453
          %489 = vmatprep.subr.mxu0 0.0
          %490 = vmatpush1.msra.mxu0 %v452
          %491 = vmatprep.subr.mxu0 0.0
          %492 = vmatpush2.msra.mxu0 0.0
          %493 = vmatprep.subr.mxu0 0.0
          %494 = vmatpush2.msra.mxu0 0.0
          %495 = vmatprep.subr.mxu0 0.0
          %496 = vmatpush2.msra.mxu0 0.0
          %497 = vmatprep.subr.mxu0 0.0
          %498 = vmatpush2.msra.mxu0 0.0
          %499 = vmatprep.subr.mxu0 0.0
          %500 = vmatpush2.msra.mxu0 0.0
          %501 = vmatprep.subr.mxu0 0.0
          %502 = vmatpush2.msra.mxu0 0.0
          %503 = vmatprep.subr.mxu0 0.0
          %504 = vmatpush2.msra.mxu0 0.0
          %505 = vmatprep.subr.mxu0 0.0
          %506 = vmatpush2.msra.mxu0 0.0
          %507 = vmatprep.subr.mxu0 0.0
          %508 = vmatpush2.msra.mxu0 0.0
          %509 = vmatprep.subr.mxu0 0.0
          %510 = vmatpush2.msra.mxu0 0.0
          %511 = vmatprep.subr.mxu0 0.0
          %512 = vmatpush2.msra.mxu0 0.0
          %513 = vmatprep.subr.mxu0 0.0
          %514 = vmatpush2.msra.mxu0 0.0
          %515 = vmatprep.subr.mxu0 0.0
          %516 = vmatpush2.msra.mxu0 0.0
          %517 = vmatprep.subr.mxu0 0.0
          %518 = vmatpush2.msra.mxu0 0.0
          %519 = vmatprep.subr.mxu0 0.0
          %520 = vmatpush2.msra.mxu0 0.0
          %521 = vmatprep.subr.mxu0 0.0
          %522 = vmatpush2.msra.mxu0 0.0
          %523 = vmatprep.mubr.f32.mxu0 0.0
          %524 = vmatmul.mubr.f32.gmra.mxu0 %v457
          %v525 = vpop.f32.mrf.mxu0
          %v526 = vadd.f32 0.0, %v525
          %v527 = vpop.f32.mrf.mxu0
          %528 = vdwg.mxu0
          %529 = vst.msk [vmem:[#allocation2] sm:$0xff] %vm421, %v526
          %v530 = vld [vmem:[#allocation10] sm:$0xff]
          %v531 = vld [vmem:[#allocation10 + $0x8] sm:$0xff]
          %v532 = vld [vmem:[#allocation10 + $0x10] sm:$0xff]
          %v533 = vld [vmem:[#allocation10 + $0x18] sm:$0xff]
          %534 = vmatprep.subr.mxu0 0.0
          %535 = vmatpush1.msra.mxu0 0.0
          %536 = vmatprep.subr.mxu0 0.0
          %537 = vmatpush1.msra.mxu0 0.0
          %538 = vmatprep.subr.mxu0 0.0
          %539 = vmatpush1.msra.mxu0 0.0
          %540 = vmatprep.subr.mxu0 0.0
          %541 = vmatpush1.msra.mxu0 0.0
          %542 = vmatprep.subr.mxu0 0.0
          %543 = vmatpush1.msra.mxu0 0.0
          %544 = vmatprep.subr.mxu0 0.0
          %545 = vmatpush1.msra.mxu0 0.0
          %546 = vmatprep.subr.mxu0 0.0
          %547 = vmatpush1.msra.mxu0 0.0
          %548 = vmatprep.subr.mxu0 0.0
          %549 = vmatpush1.msra.mxu0 0.0
          %550 = vmatprep.subr.mxu0 0.0
          %551 = vmatpush1.msra.mxu0 0.0
          %552 = vmatprep.subr.mxu0 0.0
          %553 = vmatpush1.msra.mxu0 0.0
          %554 = vmatprep.subr.mxu0 0.0
          %555 = vmatpush1.msra.mxu0 0.0
          %556 = vmatprep.subr.mxu0 0.0
          %557 = vmatpush1.msra.mxu0 0.0
          %558 = vmatprep.subr.mxu0 0.0
          %559 = vmatpush1.msra.mxu0 %v533
          %560 = vmatprep.subr.mxu0 0.0
          %561 = vmatpush1.msra.mxu0 %v532
          %562 = vmatprep.subr.mxu0 0.0
          %563 = vmatpush1.msra.mxu0 %v531
          %564 = vmatprep.subr.mxu0 0.0
          %565 = vmatpush1.msra.mxu0 %v530
          %566 = vmatprep.subr.mxu0 0.0
          %567 = vmatpush2.msra.mxu0 0.0
          %568 = vmatprep.subr.mxu0 0.0
          %569 = vmatpush2.msra.mxu0 0.0
          %570 = vmatprep.subr.mxu0 0.0
          %571 = vmatpush2.msra.mxu0 0.0
          %572 = vmatprep.subr.mxu0 0.0
          %573 = vmatpush2.msra.mxu0 0.0
          %574 = vmatprep.subr.mxu0 0.0
          %575 = vmatpush2.msra.mxu0 0.0
          %576 = vmatprep.subr.mxu0 0.0
          %577 = vmatpush2.msra.mxu0 0.0
          %578 = vmatprep.subr.mxu0 0.0
          %579 = vmatpush2.msra.mxu0 0.0
          %580 = vmatprep.subr.mxu0 0.0
          %581 = vmatpush2.msra.mxu0 0.0
          %582 = vmatprep.subr.mxu0 0.0
          %583 = vmatpush2.msra.mxu0 0.0
          %584 = vmatprep.subr.mxu0 0.0
          %585 = vmatpush2.msra.mxu0 0.0
          %586 = vmatprep.subr.mxu0 0.0
          %587 = vmatpush2.msra.mxu0 0.0
          %588 = vmatprep.subr.mxu0 0.0
          %589 = vmatpush2.msra.mxu0 0.0
          %590 = vmatprep.subr.mxu0 0.0
          %591 = vmatpush2.msra.mxu0 0.0
          %592 = vmatprep.subr.mxu0 0.0
          %593 = vmatpush2.msra.mxu0 0.0
          %594 = vmatprep.subr.mxu0 0.0
          %595 = vmatpush2.msra.mxu0 0.0
          %596 = vmatprep.subr.mxu0 0.0
          %597 = vmatpush2.msra.mxu0 0.0
          %598 = vmatprep.mubr.f32.mxu0 0.0
          %599 = vmatmul.mubr.f32.gmra.mxu0 %v457
          %v600 = vpop.f32.mrf.mxu0
          %v601 = vadd.f32 0.0, %v600
          %v602 = vpop.f32.mrf.mxu0
          %603 = vdwg.mxu0
          %604 = vst.msk [vmem:[#allocation3] sm:$0xff] %vm421, %v601
          %v605 = vld [vmem:[#allocation11] sm:$0xff]
          %v606 = vld [vmem:[#allocation11 + $0x8] sm:$0xff]
          %v607 = vld [vmem:[#allocation11 + $0x10] sm:$0xff]
          %v608 = vld [vmem:[#allocation11 + $0x18] sm:$0xff]
          %609 = vmatprep.subr.mxu0 0.0
          %610 = vmatpush1.msra.mxu0 0.0
          %611 = vmatprep.subr.mxu0 0.0
          %612 = vmatpush1.msra.mxu0 0.0
          %613 = vmatprep.subr.mxu0 0.0
          %614 = vmatpush1.msra.mxu0 0.0
          %615 = vmatprep.subr.mxu0 0.0
          %616 = vmatpush1.msra.mxu0 0.0
          %617 = vmatprep.subr.mxu0 0.0
          %618 = vmatpush1.msra.mxu0 0.0
          %619 = vmatprep.subr.mxu0 0.0
          %620 = vmatpush1.msra.mxu0 0.0
          %621 = vmatprep.subr.mxu0 0.0
          %622 = vmatpush1.msra.mxu0 0.0
          %623 = vmatprep.subr.mxu0 0.0
          %624 = vmatpush1.msra.mxu0 0.0
          %625 = vmatprep.subr.mxu0 0.0
          %626 = vmatpush1.msra.mxu0 0.0
          %627 = vmatprep.subr.mxu0 0.0
          %628 = vmatpush1.msra.mxu0 0.0
          %629 = vmatprep.subr.mxu0 0.0
          %630 = vmatpush1.msra.mxu0 0.0
          %631 = vmatprep.subr.mxu0 0.0
          %632 = vmatpush1.msra.mxu0 0.0
          %633 = vmatprep.subr.mxu0 0.0
          %634 = vmatpush1.msra.mxu0 %v608
          %635 = vmatprep.subr.mxu0 0.0
          %636 = vmatpush1.msra.mxu0 %v607
          %637 = vmatprep.subr.mxu0 0.0
          %638 = vmatpush1.msra.mxu0 %v606
          %639 = vmatprep.subr.mxu0 0.0
          %640 = vmatpush1.msra.mxu0 %v605
          %641 = vmatprep.subr.mxu0 0.0
          %642 = vmatpush2.msra.mxu0 0.0
          %643 = vmatprep.subr.mxu0 0.0
          %644 = vmatpush2.msra.mxu0 0.0
          %645 = vmatprep.subr.mxu0 0.0
          %646 = vmatpush2.msra.mxu0 0.0
          %647 = vmatprep.subr.mxu0 0.0
          %648 = vmatpush2.msra.mxu0 0.0
          %649 = vmatprep.subr.mxu0 0.0
          %650 = vmatpush2.msra.mxu0 0.0
          %651 = vmatprep.subr.mxu0 0.0
          %652 = vmatpush2.msra.mxu0 0.0
          %653 = vmatprep.subr.mxu0 0.0
          %654 = vmatpush2.msra.mxu0 0.0
          %655 = vmatprep.subr.mxu0 0.0
          %656 = vmatpush2.msra.mxu0 0.0
          %657 = vmatprep.subr.mxu0 0.0
          %658 = vmatpush2.msra.mxu0 0.0
          %659 = vmatprep.subr.mxu0 0.0
          %660 = vmatpush2.msra.mxu0 0.0
          %661 = vmatprep.subr.mxu0 0.0
          %662 = vmatpush2.msra.mxu0 0.0
          %663 = vmatprep.subr.mxu0 0.0
          %664 = vmatpush2.msra.mxu0 0.0
          %665 = vmatprep.subr.mxu0 0.0
          %666 = vmatpush2.msra.mxu0 0.0
          %667 = vmatprep.subr.mxu0 0.0
          %668 = vmatpush2.msra.mxu0 0.0
          %669 = vmatprep.subr.mxu0 0.0
          %670 = vmatpush2.msra.mxu0 0.0
          %671 = vmatprep.subr.mxu0 0.0
          %672 = vmatpush2.msra.mxu0 0.0
          %673 = vmatprep.mubr.f32.mxu0 0.0
          %674 = vmatmul.mubr.f32.gmra.mxu0 %v457
          %v675 = vpop.f32.mrf.mxu0
          %v676 = vadd.f32 0.0, %v675
          %v677 = vpop.f32.mrf.mxu0
          %678 = vdwg.mxu0
          %679 = vst.msk [vmem:[#allocation4] sm:$0xff] %vm421, %v676
        $region76: #{tpu_custom_call.1} parent=51 // pred_fallthru
          _
        %s680 = smul.u32 %s35, 8
        %s681 = scalar_lea.vmem [#allocation2], %s680
        %v682 = vld [vmem:[%s681] sm:$0xff]
        %v683 = vld [vmem:[#allocation3] sm:$0xff]
        %vm684 = vcmask 261120
        %v686 = vsel %vm684, %v682, 0
        %v689 = vsel %vm684, %v683, 0
        %691 = vmatprep.subr.mxu0 0.0
        %692 = vmatpush1.xpose.msra.mxu0 0.0
        %693 = vmatprep.subr.mxu0 0.0
        %694 = vmatpush1.xpose.msra.mxu0 0.0
        %695 = vmatprep.subr.mxu0 0.0
        %696 = vmatpush1.xpose.msra.mxu0 0.0
        %697 = vmatprep.subr.mxu0 0.0
        %698 = vmatpush1.xpose.msra.mxu0 0.0
        %699 = vmatprep.subr.mxu0 0.0
        %700 = vmatpush1.xpose.msra.mxu0 0.0
        %701 = vmatprep.subr.mxu0 0.0
        %702 = vmatpush1.xpose.msra.mxu0 0.0
        %703 = vmatprep.subr.mxu0 0.0
        %704 = vmatpush1.xpose.msra.mxu0 0.0
        %705 = vmatprep.subr.mxu0 0.0
        %706 = vmatpush1.xpose.msra.mxu0 0.0
        %707 = vmatprep.subr.mxu0 0.0
        %708 = vmatpush1.xpose.msra.mxu0 0.0
        %709 = vmatprep.subr.mxu0 0.0
        %710 = vmatpush1.xpose.msra.mxu0 0.0
        %711 = vmatprep.subr.mxu0 0.0
        %712 = vmatpush1.xpose.msra.mxu0 0.0
        %713 = vmatprep.subr.mxu0 0.0
        %714 = vmatpush1.xpose.msra.mxu0 0.0
        %715 = vmatprep.subr.mxu0 0.0
        %716 = vmatpush1.xpose.msra.mxu0 0.0
        %717 = vmatprep.subr.mxu0 0.0
        %718 = vmatpush1.xpose.msra.mxu0 0.0
        %719 = vmatprep.subr.mxu0 0.0
        %720 = vmatpush1.xpose.msra.mxu0 0.0
        %721 = vmatprep.subr.mxu0 0.0
        %722 = vmatpush1.xpose.msra.mxu0 %v689
        %723 = vmatprep.subr.mxu0 0.0
        %724 = vmatpush2.xpose.msra.mxu0 0.0
        %725 = vmatprep.subr.mxu0 0.0
        %726 = vmatpush2.xpose.msra.mxu0 0.0
        %727 = vmatprep.subr.mxu0 0.0
        %728 = vmatpush2.xpose.msra.mxu0 0.0
        %729 = vmatprep.subr.mxu0 0.0
        %730 = vmatpush2.xpose.msra.mxu0 0.0
        %731 = vmatprep.subr.mxu0 0.0
        %732 = vmatpush2.xpose.msra.mxu0 0.0
        %733 = vmatprep.subr.mxu0 0.0
        %734 = vmatpush2.xpose.msra.mxu0 0.0
        %735 = vmatprep.subr.mxu0 0.0
        %736 = vmatpush2.xpose.msra.mxu0 0.0
        %737 = vmatprep.subr.mxu0 0.0
        %738 = vmatpush2.xpose.msra.mxu0 0.0
        %739 = vmatprep.subr.mxu0 0.0
        %740 = vmatpush2.xpose.msra.mxu0 0.0
        %741 = vmatprep.subr.mxu0 0.0
        %742 = vmatpush2.xpose.msra.mxu0 0.0
        %743 = vmatprep.subr.mxu0 0.0
        %744 = vmatpush2.xpose.msra.mxu0 0.0
        %745 = vmatprep.subr.mxu0 0.0
        %746 = vmatpush2.xpose.msra.mxu0 0.0
        %747 = vmatprep.subr.mxu0 0.0
        %748 = vmatpush2.xpose.msra.mxu0 0.0
        %749 = vmatprep.subr.mxu0 0.0
        %750 = vmatpush2.xpose.msra.mxu0 0.0
        %751 = vmatprep.subr.mxu0 0.0
        %752 = vmatpush2.xpose.msra.mxu0 0.0
        %753 = vmatprep.subr.mxu0 0.0
        %754 = vmatpush2.xpose.msra.mxu0 0.0
        %755 = vmatprep.mubr.f32.mxu0 0.0
        %756 = vmatmul.mubr.f32.gmra.mxu0 %v686
        %v757 = vpop.f32.mrf.mxu0
        %v758 = vadd.f32 0.0, %v757
        %v759 = vpop.f32.mrf.mxu0
        %760 = vdwg.mxu0
        %v761 = vmul.f32 %v758, 0.17677669
        %v762 = vlaneseq
        %v763 = vshrl.u32 %v762, 7
        %v764 = vstv %s680
        %v765 = vadd.s32 %v764, %v763
        %v766 = vlaneseq
        %v767 = vand.u32 %v766, 127
        %vm768 = vcmp.gt.s32.totalorder %v767, %v765
        %v769 = vsel %vm768, -3.4028235e+38, %v761
        %vm770 = vcmask 64512
        %v771 = vsel %vm770, %v769, -inf
        %772 = vmax.xlane.f32.xlu0 %v771
        %v773 = vpop.xlane.xlu0 %772
        %v774 = vsub.f32 %v769, %v773
        %v775 = vmul.f32 %v774, 1.442695
        %v776 = vpow.pop %v775
        %v777 = vsel %vm770, %v776, 0.0
        %778 = vadd.xlane.f32.xlu0 %v777
        %v779 = vpop.xlane.xlu0 %778
        %v780 = vrcp.pop %v779
        %v781 = vmul.f32 %v776, %v780
        %782 = vst.msk [vmem:[%s415] sm:$0xff] %vm770, %v781
        %v783 = vld [vmem:[#allocation4] sm:$0xff]
        %v785 = vsel %vm770, %v781, 0
        %787 = vmatprep.subr.mxu0 0.0
        %788 = vmatpush1.msra.mxu0 0.0
        %789 = vmatprep.subr.mxu0 0.0
        %790 = vmatpush1.msra.mxu0 0.0
        %791 = vmatprep.subr.mxu0 0.0
        %792 = vmatpush1.msra.mxu0 0.0
        %793 = vmatprep.subr.mxu0 0.0
        %794 = vmatpush1.msra.mxu0 0.0
        %795 = vmatprep.subr.mxu0 0.0
        %796 = vmatpush1.msra.mxu0 0.0
        %797 = vmatprep.subr.mxu0 0.0
        %798 = vmatpush1.msra.mxu0 0.0
        %799 = vmatprep.subr.mxu0 0.0
        %800 = vmatpush1.msra.mxu0 0.0
        %801 = vmatprep.subr.mxu0 0.0
        %802 = vmatpush1.msra.mxu0 0.0
        %803 = vmatprep.subr.mxu0 0.0
        %804 = vmatpush1.msra.mxu0 0.0
        %805 = vmatprep.subr.mxu0 0.0
        %806 = vmatpush1.msra.mxu0 0.0
        %807 = vmatprep.subr.mxu0 0.0
        %808 = vmatpush1.msra.mxu0 0.0
        %809 = vmatprep.subr.mxu0 0.0
        %810 = vmatpush1.msra.mxu0 0.0
        %811 = vmatprep.subr.mxu0 0.0
        %812 = vmatpush1.msra.mxu0 0.0
        %813 = vmatprep.subr.mxu0 0.0
        %814 = vmatpush1.msra.mxu0 0.0
        %815 = vmatprep.subr.mxu0 0.0
        %816 = vmatpush1.msra.mxu0 0.0
        %817 = vmatprep.subr.mxu0 0.0
        %818 = vmatpush1.msra.mxu0 %v783
        %819 = vmatprep.subr.mxu0 0.0
        %820 = vmatpush2.msra.mxu0 0.0
        %821 = vmatprep.subr.mxu0 0.0
        %822 = vmatpush2.msra.mxu0 0.0
        %823 = vmatprep.subr.mxu0 0.0
        %824 = vmatpush2.msra.mxu0 0.0
        %825 = vmatprep.subr.mxu0 0.0
        %826 = vmatpush2.msra.mxu0 0.0
        %827 = vmatprep.subr.mxu0 0.0
        %828 = vmatpush2.msra.mxu0 0.0
        %829 = vmatprep.subr.mxu0 0.0
        %830 = vmatpush2.msra.mxu0 0.0
        %831 = vmatprep.subr.mxu0 0.0
        %832 = vmatpush2.msra.mxu0 0.0
        %833 = vmatprep.subr.mxu0 0.0
        %834 = vmatpush2.msra.mxu0 0.0
        %835 = vmatprep.subr.mxu0 0.0
        %836 = vmatpush2.msra.mxu0 0.0
        %837 = vmatprep.subr.mxu0 0.0
        %838 = vmatpush2.msra.mxu0 0.0
        %839 = vmatprep.subr.mxu0 0.0
        %840 = vmatpush2.msra.mxu0 0.0
        %841 = vmatprep.subr.mxu0 0.0
        %842 = vmatpush2.msra.mxu0 0.0
        %843 = vmatprep.subr.mxu0 0.0
        %844 = vmatpush2.msra.mxu0 0.0
        %845 = vmatprep.subr.mxu0 0.0
        %846 = vmatpush2.msra.mxu0 0.0
        %847 = vmatprep.subr.mxu0 0.0
        %848 = vmatpush2.msra.mxu0 0.0
        %849 = vmatprep.subr.mxu0 0.0
        %850 = vmatpush2.msra.mxu0 0.0
        %851 = vmatprep.mubr.f32.mxu0 0.0
        %852 = vmatmul.mubr.f32.gmra.mxu0 %v785
        %v853 = vpop.f32.mrf.mxu0
        %v854 = vadd.f32 0.0, %v853
        %v855 = vpop.f32.mrf.mxu0
        %856 = vdwg.mxu0
        %v857 = vld [vmem:[#allocation13] sm:$0xff]
        %v858 = vld [vmem:[#allocation13 + $0x8] sm:$0xff]
        %v859 = vld [vmem:[#allocation13 + $0x10] sm:$0xff]
        %v860 = vld [vmem:[#allocation13 + $0x18] sm:$0xff]
        %v861 = vld [vmem:[%s7] sm:$0x1]
        %v863 = vlaneseq
        %v864 = vshrl.u32 %v863, 7
        %v865 = vsub.s32 0, %v864
        %v866 = vrot.slane %v861, %v865
        %v869 = vsel %vm684, %v854, 0
        %871 = vmatprep.subr.mxu0 0.0
        %872 = vmatpush1.msra.mxu0 0.0
        %873 = vmatprep.subr.mxu0 0.0
        %874 = vmatpush1.msra.mxu0 0.0
        %875 = vmatprep.subr.mxu0 0.0
        %876 = vmatpush1.msra.mxu0 0.0
        %877 = vmatprep.subr.mxu0 0.0
        %878 = vmatpush1.msra.mxu0 0.0
        %879 = vmatprep.subr.mxu0 0.0
        %880 = vmatpush1.msra.mxu0 0.0
        %881 = vmatprep.subr.mxu0 0.0
        %882 = vmatpush1.msra.mxu0 0.0
        %883 = vmatprep.subr.mxu0 0.0
        %884 = vmatpush1.msra.mxu0 0.0
        %885 = vmatprep.subr.mxu0 0.0
        %886 = vmatpush1.msra.mxu0 0.0
        %887 = vmatprep.subr.mxu0 0.0
        %888 = vmatpush1.msra.mxu0 0.0
        %889 = vmatprep.subr.mxu0 0.0
        %890 = vmatpush1.msra.mxu0 0.0
        %891 = vmatprep.subr.mxu0 0.0
        %892 = vmatpush1.msra.mxu0 0.0
        %893 = vmatprep.subr.mxu0 0.0
        %894 = vmatpush1.msra.mxu0 0.0
        %895 = vmatprep.subr.mxu0 0.0
        %896 = vmatpush1.msra.mxu0 %v860
        %897 = vmatprep.subr.mxu0 0.0
        %898 = vmatpush1.msra.mxu0 %v859
        %899 = vmatprep.subr.mxu0 0.0
        %900 = vmatpush1.msra.mxu0 %v858
        %901 = vmatprep.subr.mxu0 0.0
        %902 = vmatpush1.msra.mxu0 %v857
        %903 = vmatprep.subr.mxu0 0.0
        %904 = vmatpush2.msra.mxu0 0.0
        %905 = vmatprep.subr.mxu0 0.0
        %906 = vmatpush2.msra.mxu0 0.0
        %907 = vmatprep.subr.mxu0 0.0
        %908 = vmatpush2.msra.mxu0 0.0
        %909 = vmatprep.subr.mxu0 0.0
        %910 = vmatpush2.msra.mxu0 0.0
        %911 = vmatprep.subr.mxu0 0.0
        %912 = vmatpush2.msra.mxu0 0.0
        %913 = vmatprep.subr.mxu0 0.0
        %914 = vmatpush2.msra.mxu0 0.0
        %915 = vmatprep.subr.mxu0 0.0
        %916 = vmatpush2.msra.mxu0 0.0
        %917 = vmatprep.subr.mxu0 0.0
        %918 = vmatpush2.msra.mxu0 0.0
        %919 = vmatprep.subr.mxu0 0.0
        %920 = vmatpush2.msra.mxu0 0.0
        %921 = vmatprep.subr.mxu0 0.0
        %922 = vmatpush2.msra.mxu0 0.0
        %923 = vmatprep.subr.mxu0 0.0
        %924 = vmatpush2.msra.mxu0 0.0
        %925 = vmatprep.subr.mxu0 0.0
        %926 = vmatpush2.msra.mxu0 0.0
        %927 = vmatprep.subr.mxu0 0.0
        %928 = vmatpush2.msra.mxu0 0.0
        %929 = vmatprep.subr.mxu0 0.0
        %930 = vmatpush2.msra.mxu0 0.0
        %931 = vmatprep.subr.mxu0 0.0
        %932 = vmatpush2.msra.mxu0 0.0
        %933 = vmatprep.subr.mxu0 0.0
        %934 = vmatpush2.msra.mxu0 0.0
        %935 = vmatprep.mubr.f32.mxu0 0.0
        %936 = vmatmul.mubr.f32.gmra.mxu0 %v869
        %v937 = vpop.f32.mrf.mxu0
        %v938 = vadd.f32 %v866, %v937
        %v939 = vpop.f32.mrf.mxu0
        %940 = vdwg.mxu0
        %941 = vst.msk [vmem:[%s408] sm:$0xff] %vm684, %v938
        %s942 = sand.u32 %s225, 1
        %s943 = scalar_lea.sflag [#allocation7], %s942
        %s944 = sand.u32 %s225, 1
        %s945 = smul.addr %s944, 8
        %s946 = scalar_lea.vmem [#allocation14], %s945
        %s947 = sand.u32 %s253, 1
        %s948 = scalar_lea.sflag [#allocation16], %s947
        %s949 = sand.u32 %s253, 1
        %s950 = smul.addr %s949, 8
        %s951 = scalar_lea.vmem [#allocation15], %s950
        // Predicated region
        $region77: #{tpu_custom_call.1} parent=51 // pred_check
          %p952 = pneg %p235
        $region78: #{tpu_custom_call.1} parent=51 // pred_check_branch
          %954 = sbr.rel (%p952) target = $region80
        $region79: #{tpu_custom_call.1} parent=51 // pred_region
          %s956 = ssub.s32 128, 128
          %957 = vsyncadd %s943, %s956
          %s958 = sadd.s32 %s35, %s34
          %s959 = smul.addr %s958, 128
          %s960 = scalar_lea.hbm %s8, %s959
          %s962 = sshll.u32 %s946, 4
          %s963 = int_to_ptr.vmem [resolvable:$true] %s962
          %965 = dma.vmem_to_hbm [thread:$0]  %s963, 128, %s960, %s943
        $region80: #{tpu_custom_call.1} parent=51 // pred_fallthru
          _
        // Predicated region
        $region81: #{tpu_custom_call.1} parent=51 // pred_check
          %p966 = pneg %p263
        $region82: #{tpu_custom_call.1} parent=51 // pred_check_branch
          %968 = sbr.rel (%p966) target = $region84
        $region83: #{tpu_custom_call.1} parent=51 // pred_region
          %s970 = ssub.s32 128, 128
          %971 = vsyncadd %s948, %s970
          %s972 = sadd.s32 %s35, %s34
          %s973 = smul.addr %s972, 128
          %s974 = scalar_lea.hbm %s9, %s973
          %s976 = sshll.u32 %s951, 4
          %s977 = int_to_ptr.vmem [resolvable:$true] %s976
          %979 = dma.vmem_to_hbm [thread:$0]  %s977, 128, %s974, %s948
        $region84: #{tpu_custom_call.1} parent=51 // pred_fallthru
          _
      $region52: #{tpu_custom_call.1} parent=5 // pred_fallthru
        _
      %p980 = scmp.le.s32.totalorder 2, %s25
      // Predicated region
      $region85: #{tpu_custom_call.1} parent=5 // pred_check
        %p981 = pneg %p980
      $region86: #{tpu_custom_call.1} parent=5 // pred_check_branch
        %983 = sbr.rel (%p981) target = $region88
      $region87: #{tpu_custom_call.1} parent=5 // pred_region
        %s984 = ssub.s32 %s25, 2
        // Predicated region
        $region89: #{tpu_custom_call.1} parent=87 // pred_check
          %p985 = pneg %p241
        $region90: #{tpu_custom_call.1} parent=87 // pred_check_branch
          %987 = sbr.rel (%p985) target = $region92
        $region91: #{tpu_custom_call.1} parent=87 // pred_region
          %s988 = sand.u32 %s226, 1
          %s989 = scalar_lea.sflag [#allocation7], %s988
          %s990 = sand.u32 %s226, 1
          %s991 = smul.addr %s990, 8
          %s992 = scalar_lea.vmem [#allocation14], %s991
          %993 = dma.done %s989, 128
        $region92: #{tpu_custom_call.1} parent=87 // pred_fallthru
          _
        // Predicated region
        $region93: #{tpu_custom_call.1} parent=87 // pred_check
          %p994 = pneg %p269
        $region94: #{tpu_custom_call.1} parent=87 // pred_check_branch
          %996 = sbr.rel (%p994) target = $region96
        $region95: #{tpu_custom_call.1} parent=87 // pred_region
          %s997 = sand.u32 %s254, 1
          %s998 = scalar_lea.sflag [#allocation16], %s997
          %s999 = sand.u32 %s254, 1
          %s1000 = smul.addr %s999, 8
          %s1001 = scalar_lea.vmem [#allocation15], %s1000
          %1002 = dma.done %s998, 128
        $region96: #{tpu_custom_call.1} parent=87 // pred_fallthru
          _
      $region88: #{tpu_custom_call.1} parent=5 // pred_fallthru
        _
    $region6: #{tpu_custom_call.1} parent=1 // loop_footer
      %s29 = sadd.s32 1, %s25
    $region7: #{tpu_custom_call.1} parent=1 // loop_footer_branch
      %24 = sbr.rel target = $region3
    $region8: #{tpu_custom_call.1} parent=1 // loop_exit
      _
    %1003 = vsyncpa [#allocation6], 1
    %s1004 = scalar_lea.sflag [#allocation6], 1
    %1005 = vsyncpa %s1004, 1
    %1006 = vsyncpa [#allocation9], 1
    %1007 = vsyncpa [#allocation12], 1
    %1008 = vsyncpa [#allocation7], 1
    %s1009 = scalar_lea.sflag [#allocation7], 1
    %1010 = vsyncpa %s1009, 1
    %1011 = vsyncpa [#allocation16], 1
    %s1012 = scalar_lea.sflag [#allocation16], 1
    %1013 = vsyncpa %s1012, 1

// kernel: tpu_custom_call.1
$region0: #{tpu_custom_call.1}
  #allocation0 [shape = 'u32[]', space=smem, size = 0x4, offset = 0x4, fixed_abs, tag = 'smem constant byte address 0x4 - core index']
  #allocation1 [shape = 'u32[144,128]{1,0:T(1,128)}', space=vmem, size = 0x12000, scoped, tag = 'internal scratch']
  #allocation2 [shape = 'f32[8,32]{1,0:T(8,128)}', space=vmem, size = 0x1000, scoped, tag = 'scratch operand']
  #allocation3 [shape = 'f32[8,32]{1,0:T(8,128)}', space=vmem, size = 0x1000, scoped, tag = 'scratch operand']
  #allocation4 [shape = 'f32[8,32]{1,0:T(8,128)}', space=vmem, size = 0x1000, scoped, tag = 'scratch operand']
  %s0 = inlined_call_operand.hbm [shape: f32[2,8,32], index: 0, kind: input, shape index: {}]
  %s1 = inlined_call_operand.vmem [shape: f32[1,32], index: 1, kind: input, shape index: {}]
  %s2 = inlined_call_operand.vmem [shape: f32[1,32], index: 2, kind: input, shape index: {}]
  %s3 = inlined_call_operand.hbm [shape: f32[32,32], index: 3, kind: input, shape index: {}]
  %s4 = inlined_call_operand.hbm [shape: f32[32,32], index: 4, kind: input, shape index: {}]
  %s5 = inlined_call_operand.hbm [shape: f32[32,32], index: 5, kind: input, shape index: {}]
  %s6 = inlined_call_operand.hbm [shape: f32[32,32], index: 6, kind: input, shape index: {}]
  %s7 = inlined_call_operand.vmem [shape: f32[1,32], index: 7, kind: input, shape index: {}]
  %s8 = inlined_call_operand.hbm [shape: f32[2,8,32], index: 8, kind: output, shape index: {0}]
  %s9 = inlined_call_operand.hbm [shape: f32[2,8,8], index: 9, kind: output, shape index: {1}]
  %10 = xla_tuple %s8, %s9
  %s11 = sld [smem:[#allocation0]]
  $region97: #{tpu_custom_call.1} parent=0
    _
  %s13 = ssub.s32 1, %s11
  %s14 = scalar_select 0, %s13, %s11
  $region1: #{tpu_custom_call.1} parent=0
    #allocation5 [shape = 'u8[8192]{0}', space=vmem, size = 0x2000, scoped, tag = 'input window, operand 0']
    #allocation6 [shape = 's32[2]{0}', space=sflag, size = 0x8, scoped, tag = 'scoped memory for tpu_custom_call.1']
    #allocation7 [shape = 's32[2]{0}', space=sflag, size = 0x8, scoped, tag = 'scoped memory for tpu_custom_call.1']
    #allocation8 [shape = 'u8[16384]{0}', space=vmem, size = 0x4000, scoped, tag = 'input window, operand 3, single buffered']
    #allocation9 [shape = 's32[1]{0}', space=sflag, size = 0x4, scoped, tag = 'scoped memory for tpu_custom_call.1']
    #allocation10 [shape = 'u8[16384]{0}', space=vmem, size = 0x4000, scoped, tag = 'input window, operand 4, single buffered']
    #allocation11 [shape = 'u8[16384]{0}', space=vmem, size = 0x4000, scoped, tag = 'input window, operand 5, single buffered']
    #allocation12 [shape = 's32[1]{0}', space=sflag, size = 0x4, scoped, tag = 'scoped memory for tpu_custom_call.1']
    #allocation13 [shape = 'u8[16384]{0}', space=vmem, size = 0x4000, scoped, tag = 'input window, operand 6, single buffered']
    #allocation14 [shape = 'u8[8192]{0}', space=vmem, size = 0x2000, scoped, tag = 'output window, operand 0']
    #allocation15 [shape = 'u8[8192]{0}', space=vmem, size = 0x2000, scoped, tag = 'output window, operand 1']
    #allocation16 [shape = 's32[2]{0}', space=sflag, size = 0x8, scoped, tag = 'scoped memory for tpu_custom_call.1']
    %15 = vsyncpa [#allocation6], 0
    %s16 = scalar_lea.sflag [#allocation6], 1
    %17 = vsyncpa %s16, 0
    %18 = vsyncpa [#allocation9], 0
    %19 = vsyncpa [#allocation12], 0
    %20 = vsyncpa [#allocation7], 0
    %s21 = scalar_lea.sflag [#allocation7], 1
    %22 = vsyncpa %s21, 0
    %23 = vsyncpa [#allocation16], 0
    %s24 = scalar_lea.sflag [#allocation16], 1
    %25 = vsyncpa %s24, 0
    loop: start=0, step=1, limit=4
    $region2: #{tpu_custom_call.1} parent=1 // loop_pre_header
      _
    $region3: #{tpu_custom_call.1} parent=1 // loop_header
      %s27 = sphi 0, %s31
      %p28 = scmp.ge.s32.totalorder %s27, 4
      %s34 = sphi 0, %s46
      %s35 = sphi 0, %s42
      %s36 = sphi 0, %s34
      %s37 = sphi 0, %s35
      %s38 = sphi 0, %s36
      %s39 = sphi 0, %s37
      %s49 = sphi 0, %s51
      %s52 = sphi 0, %s49
      %s53 = sphi 0, %s52
      %s69 = sphi 0, %s53
      %s73 = sphi 0, %s73
      %s75 = sphi 0, %s73
      %s76 = sphi 0, %s75
      %s90 = sphi 0, %s76
      %s94 = sphi 0, %s94
      %s96 = sphi 0, %s94
      %s97 = sphi 0, %s96
      %s111 = sphi 0, %s97
      %s115 = sphi 0, %s115
      %s117 = sphi 0, %s115
      %s118 = sphi 0, %s117
      %s132 = sphi 0, %s118
      %s136 = sphi 0, %s136
      %s138 = sphi 0, %s136
      %s139 = sphi 0, %s138
      %s153 = sphi 0, %s139
      %s157 = sphi 0, %s157
      %s159 = sphi 0, %s157
      %s160 = sphi 0, %s159
      %s174 = sphi 0, %s160
      %s178 = sphi 0, %s178
      %s180 = sphi 0, %s178
      %s181 = sphi 0, %s180
      %s195 = sphi 0, %s181
      %s199 = sphi 0, %s199
      %s201 = sphi 0, %s199
      %s202 = sphi 0, %s201
      %s216 = sphi 0, %s202
      %s224 = sphi 0, %s226
      %s227 = sphi 0, %s224
      %s228 = sphi 0, %s227
      %s244 = sphi 0, %s228
      %s252 = sphi 0, %s254
      %s255 = sphi 0, %s252
      %s256 = sphi 0, %s255
      %s272 = sphi 0, %s256
    $region4: #{tpu_custom_call.1} parent=1 // loop_header_branch
      %30 = sbr.rel (%p28) target = $region8
    $region5: #{tpu_custom_call.1} parent=1 // loop_body
      %s32 = ssub.s32 %s27, 1
      %s33 = ssub.s32 %s27, 2
      %s40 = sadd.s32 1, %s35
      %p41 = scmp.ge.s32.totalorder %s40, 1
      %s42 = scalar_select %p41, 0, %s40
      %s43 = sadd.s32 1, %s34
      %s44 = scalar_select %p41, %s43, %s34
      %p45 = scmp.ge.s32.totalorder %s44, 2
      %s46 = scalar_select %p45, 0, %s44
      %s47 = ssub.s32 %s34, %s46
      %p48 = scmp.eq.s32.totalorder %s47, 0
      %s50 = sadd.s32 %s49, 1
      %s51 = scalar_select %p48, %s49, %s50
      %p54 = pneg %p48
      %p55 = scmp.eq.s32.totalorder %s27, 1
      %p56 = por %p54, %p55
      %p57 = scmp.ne.s32.totalorder %s49, %s52
      %p58 = scmp.eq.s32.totalorder %s27, 0
      %p59 = por %p57, %p58
      %p60 = scmp.ne.s32.totalorder %s49, %s52
      %p61 = scmp.eq.s32.totalorder %s32, 1
      %p62 = por %p60, %p61
      %p63 = scmp.ne.s32.totalorder %s52, %s53
      %p64 = scmp.eq.s32.totalorder %s32, 0
      %p65 = por %p63, %p64
      %p66 = scmp.ne.s32.totalorder %s52, %s53
      %p67 = scmp.eq.s32.totalorder %s33, 1
      %p68 = por %p66, %p67
      %p70 = scmp.ne.s32.totalorder %s53, %s69
      %p71 = scmp.eq.s32.totalorder %s33, 0
      %p72 = por %p70, %p71
      %s74 = sadd.s32 %s73, 1
      %p77 = scmp.eq.s32.totalorder %s27, 1
      %p78 = scmp.ne.s32.totalorder %s73, %s75
      %p79 = scmp.eq.s32.totalorder %s27, 0
      %p80 = por %p78, %p79
      %p81 = scmp.ne.s32.totalorder %s73, %s75
      %p82 = scmp.eq.s32.totalorder %s32, 1
      %p83 = por %p81, %p82
      %p84 = scmp.ne.s32.totalorder %s75, %s76
      %p85 = scmp.eq.s32.totalorder %s32, 0
      %p86 = por %p84, %p85
      %p87 = scmp.ne.s32.totalorder %s75, %s76
      %p88 = scmp.eq.s32.totalorder %s33, 1
      %p89 = por %p87, %p88
      %p91 = scmp.ne.s32.totalorder %s76, %s90
      %p92 = scmp.eq.s32.totalorder %s33, 0
      %p93 = por %p91, %p92
      %s95 = sadd.s32 %s94, 1
      %p98 = scmp.eq.s32.totalorder %s27, 1
      %p99 = scmp.ne.s32.totalorder %s94, %s96
      %p100 = scmp.eq.s32.totalorder %s27, 0
      %p101 = por %p99, %p100
      %p102 = scmp.ne.s32.totalorder %s94, %s96
      %p103 = scmp.eq.s32.totalorder %s32, 1
      %p104 = por %p102, %p103
      %p105 = scmp.ne.s32.totalorder %s96, %s97
      %p106 = scmp.eq.s32.totalorder %s32, 0
      %p107 = por %p105, %p106
      %p108 = scmp.ne.s32.totalorder %s96, %s97
      %p109 = scmp.eq.s32.totalorder %s33, 1
      %p110 = por %p108, %p109
      %p112 = scmp.ne.s32.totalorder %s97, %s111
      %p113 = scmp.eq.s32.totalorder %s33, 0
      %p114 = por %p112, %p113
      %s116 = sadd.s32 %s115, 1
      %p119 = scmp.eq.s32.totalorder %s27, 1
      %p120 = scmp.ne.s32.totalorder %s115, %s117
      %p121 = scmp.eq.s32.totalorder %s27, 0
      %p122 = por %p120, %p121
      %p123 = scmp.ne.s32.totalorder %s115, %s117
      %p124 = scmp.eq.s32.totalorder %s32, 1
      %p125 = por %p123, %p124
      %p126 = scmp.ne.s32.totalorder %s117, %s118
      %p127 = scmp.eq.s32.totalorder %s32, 0
      %p128 = por %p126, %p127
      %p129 = scmp.ne.s32.totalorder %s117, %s118
      %p130 = scmp.eq.s32.totalorder %s33, 1
      %p131 = por %p129, %p130
      %p133 = scmp.ne.s32.totalorder %s118, %s132
      %p134 = scmp.eq.s32.totalorder %s33, 0
      %p135 = por %p133, %p134
      %s137 = sadd.s32 %s136, 1
      %p140 = scmp.eq.s32.totalorder %s27, 1
      %p141 = scmp.ne.s32.totalorder %s136, %s138
      %p142 = scmp.eq.s32.totalorder %s27, 0
      %p143 = por %p141, %p142
      %p144 = scmp.ne.s32.totalorder %s136, %s138
      %p145 = scmp.eq.s32.totalorder %s32, 1
      %p146 = por %p144, %p145
      %p147 = scmp.ne.s32.totalorder %s138, %s139
      %p148 = scmp.eq.s32.totalorder %s32, 0
      %p149 = por %p147, %p148
      %p150 = scmp.ne.s32.totalorder %s138, %s139
      %p151 = scmp.eq.s32.totalorder %s33, 1
      %p152 = por %p150, %p151
      %p154 = scmp.ne.s32.totalorder %s139, %s153
      %p155 = scmp.eq.s32.totalorder %s33, 0
      %p156 = por %p154, %p155
      %s158 = sadd.s32 %s157, 1
      %p161 = scmp.eq.s32.totalorder %s27, 1
      %p162 = scmp.ne.s32.totalorder %s157, %s159
      %p163 = scmp.eq.s32.totalorder %s27, 0
      %p164 = por %p162, %p163
      %p165 = scmp.ne.s32.totalorder %s157, %s159
      %p166 = scmp.eq.s32.totalorder %s32, 1
      %p167 = por %p165, %p166
      %p168 = scmp.ne.s32.totalorder %s159, %s160
      %p169 = scmp.eq.s32.totalorder %s32, 0
      %p170 = por %p168, %p169
      %p171 = scmp.ne.s32.totalorder %s159, %s160
      %p172 = scmp.eq.s32.totalorder %s33, 1
      %p173 = por %p171, %p172
      %p175 = scmp.ne.s32.totalorder %s160, %s174
      %p176 = scmp.eq.s32.totalorder %s33, 0
      %p177 = por %p175, %p176
      %s179 = sadd.s32 %s178, 1
      %p182 = scmp.eq.s32.totalorder %s27, 1
      %p183 = scmp.ne.s32.totalorder %s178, %s180
      %p184 = scmp.eq.s32.totalorder %s27, 0
      %p185 = por %p183, %p184
      %p186 = scmp.ne.s32.totalorder %s178, %s180
      %p187 = scmp.eq.s32.totalorder %s32, 1
      %p188 = por %p186, %p187
      %p189 = scmp.ne.s32.totalorder %s180, %s181
      %p190 = scmp.eq.s32.totalorder %s32, 0
      %p191 = por %p189, %p190
      %p192 = scmp.ne.s32.totalorder %s180, %s181
      %p193 = scmp.eq.s32.totalorder %s33, 1
      %p194 = por %p192, %p193
      %p196 = scmp.ne.s32.totalorder %s181, %s195
      %p197 = scmp.eq.s32.totalorder %s33, 0
      %p198 = por %p196, %p197
      %s200 = sadd.s32 %s199, 1
      %p203 = scmp.eq.s32.totalorder %s27, 1
      %p204 = scmp.ne.s32.totalorder %s199, %s201
      %p205 = scmp.eq.s32.totalorder %s27, 0
      %p206 = por %p204, %p205
      %p207 = scmp.ne.s32.totalorder %s199, %s201
      %p208 = scmp.eq.s32.totalorder %s32, 1
      %p209 = por %p207, %p208
      %p210 = scmp.ne.s32.totalorder %s201, %s202
      %p211 = scmp.eq.s32.totalorder %s32, 0
      %p212 = por %p210, %p211
      %p213 = scmp.ne.s32.totalorder %s201, %s202
      %p214 = scmp.eq.s32.totalorder %s33, 1
      %p215 = por %p213, %p214
      %p217 = scmp.ne.s32.totalorder %s202, %s216
      %p218 = scmp.eq.s32.totalorder %s33, 0
      %p219 = por %p217, %p218
      %s220 = ssub.s32 %s34, %s46
      %s221 = ssub.s32 %s35, %s42
      %s222 = sor.u32 %s220, %s221
      %p223 = scmp.eq.s32.totalorder %s222, 0
      %s225 = sadd.s32 %s224, 1
      %s226 = scalar_select %p223, %s224, %s225
      %p229 = pneg %p223
      %p230 = scmp.eq.s32.totalorder %s27, 1
      %p231 = por %p229, %p230
      %p232 = scmp.ne.s32.totalorder %s224, %s227
      %p233 = scmp.eq.s32.totalorder %s27, 0
      %p234 = por %p232, %p233
      %p235 = scmp.ne.s32.totalorder %s224, %s227
      %p236 = scmp.eq.s32.totalorder %s32, 1
      %p237 = por %p235, %p236
      %p238 = scmp.ne.s32.totalorder %s227, %s228
      %p239 = scmp.eq.s32.totalorder %s32, 0
      %p240 = por %p238, %p239
      %p241 = scmp.ne.s32.totalorder %s227, %s228
      %p242 = scmp.eq.s32.totalorder %s33, 1
      %p243 = por %p241, %p242
      %p245 = scmp.ne.s32.totalorder %s228, %s244
      %p246 = scmp.eq.s32.totalorder %s33, 0
      %p247 = por %p245, %p246
      %s248 = ssub.s32 %s34, %s46
      %s249 = ssub.s32 %s35, %s42
      %s250 = sor.u32 %s248, %s249
      %p251 = scmp.eq.s32.totalorder %s250, 0
      %s253 = sadd.s32 %s252, 1
      %s254 = scalar_select %p251, %s252, %s253
      %p257 = pneg %p251
      %p258 = scmp.eq.s32.totalorder %s27, 1
      %p259 = por %p257, %p258
      %p260 = scmp.ne.s32.totalorder %s252, %s255
      %p261 = scmp.eq.s32.totalorder %s27, 0
      %p262 = por %p260, %p261
      %p263 = scmp.ne.s32.totalorder %s252, %s255
      %p264 = scmp.eq.s32.totalorder %s32, 1
      %p265 = por %p263, %p264
      %p266 = scmp.ne.s32.totalorder %s255, %s256
      %p267 = scmp.eq.s32.totalorder %s32, 0
      %p268 = por %p266, %p267
      %p269 = scmp.ne.s32.totalorder %s255, %s256
      %p270 = scmp.eq.s32.totalorder %s33, 1
      %p271 = por %p269, %p270
      %p273 = scmp.ne.s32.totalorder %s256, %s272
      %p274 = scmp.eq.s32.totalorder %s33, 0
      %p275 = por %p273, %p274
      %p276 = scmp.le.s32.totalorder 1, %s27
      %p277 = scmp.lt.s32.totalorder %s27, 3
      %p278 = pnand %p276, %p277
      %p279 = pneg %p278
      // Predicated region
      $region9: #{tpu_custom_call.1} parent=5 // pred_check
        _
      $region10: #{tpu_custom_call.1} parent=5 // pred_check_branch
        %281 = sbr.rel (%p278) target = $region12
      $region11: #{tpu_custom_call.1} parent=5 // pred_region
        %s282 = ssub.s32 %s27, 1
        // Predicated region
        $region13: #{tpu_custom_call.1} parent=11 // pred_check
          %p283 = pneg %p86
        $region14: #{tpu_custom_call.1} parent=11 // pred_check_branch
          %285 = sbr.rel (%p283) target = $region16
        $region15: #{tpu_custom_call.1} parent=11 // pred_region
          _
        $region16: #{tpu_custom_call.1} parent=11 // pred_fallthru
          _
        // Predicated region
        $region17: #{tpu_custom_call.1} parent=11 // pred_check
          %p286 = pneg %p107
        $region18: #{tpu_custom_call.1} parent=11 // pred_check_branch
          %288 = sbr.rel (%p286) target = $region20
        $region19: #{tpu_custom_call.1} parent=11 // pred_region
          _
        $region20: #{tpu_custom_call.1} parent=11 // pred_fallthru
          _
        // Predicated region
        $region21: #{tpu_custom_call.1} parent=11 // pred_check
          %p289 = pneg %p128
        $region22: #{tpu_custom_call.1} parent=11 // pred_check_branch
          %291 = sbr.rel (%p289) target = $region24
        $region23: #{tpu_custom_call.1} parent=11 // pred_region
          %s293 = ssub.s32 512, 512
          %294 = vsyncadd [#allocation9], %s293
          %s295 = sshll.u32 [#allocation8], 4
          %s296 = int_to_ptr.vmem [resolvable:$true] %s295
          %301 = dma.hbm_to_vmem [thread:$0]  %s3, 512, %s296, [#allocation9], 128, 128, 8
        $region24: #{tpu_custom_call.1} parent=11 // pred_fallthru
          _
        // Predicated region
        $region25: #{tpu_custom_call.1} parent=11 // pred_check
          %p302 = pneg %p149
        $region26: #{tpu_custom_call.1} parent=11 // pred_check_branch
          %304 = sbr.rel (%p302) target = $region28
        $region27: #{tpu_custom_call.1} parent=11 // pred_region
          %s306 = ssub.s32 512, 512
          %307 = vsyncadd [#allocation9], %s306
          %s308 = sshll.u32 [#allocation10], 4
          %s309 = int_to_ptr.vmem [resolvable:$true] %s308
          %314 = dma.hbm_to_vmem [thread:$0]  %s4, 512, %s309, [#allocation9], 128, 128, 8
        $region28: #{tpu_custom_call.1} parent=11 // pred_fallthru
          _
        // Predicated region
        $region29: #{tpu_custom_call.1} parent=11 // pred_check
          %p315 = pneg %p170
        $region30: #{tpu_custom_call.1} parent=11 // pred_check_branch
          %317 = sbr.rel (%p315) target = $region32
        $region31: #{tpu_custom_call.1} parent=11 // pred_region
          %s319 = ssub.s32 512, 512
          %320 = vsyncadd [#allocation12], %s319
          %s321 = sshll.u32 [#allocation11], 4
          %s322 = int_to_ptr.vmem [resolvable:$true] %s321
          %327 = dma.hbm_to_vmem [thread:$0]  %s5, 512, %s322, [#allocation12], 128, 128, 8
        $region32: #{tpu_custom_call.1} parent=11 // pred_fallthru
          _
        // Predicated region
        $region33: #{tpu_custom_call.1} parent=11 // pred_check
          %p328 = pneg %p191
        $region34: #{tpu_custom_call.1} parent=11 // pred_check_branch
          %330 = sbr.rel (%p328) target = $region36
        $region35: #{tpu_custom_call.1} parent=11 // pred_region
          %s332 = ssub.s32 512, 512
          %333 = vsyncadd [#allocation12], %s332
          %s334 = sshll.u32 [#allocation13], 4
          %s335 = int_to_ptr.vmem [resolvable:$true] %s334
          %340 = dma.hbm_to_vmem [thread:$0]  %s6, 512, %s335, [#allocation12], 128, 128, 8
        $region36: #{tpu_custom_call.1} parent=11 // pred_fallthru
          _
        // Predicated region
        $region37: #{tpu_custom_call.1} parent=11 // pred_check
          %p341 = pneg %p212
        $region38: #{tpu_custom_call.1} parent=11 // pred_check_branch
          %343 = sbr.rel (%p341) target = $region40
        $region39: #{tpu_custom_call.1} parent=11 // pred_region
          _
        $region40: #{tpu_custom_call.1} parent=11 // pred_fallthru
          _
      $region12: #{tpu_custom_call.1} parent=5 // pred_fallthru
        _
      %p344 = scmp.lt.s32.totalorder %s27, 2
      // Predicated region
      $region41: #{tpu_custom_call.1} parent=5 // pred_check
        %p345 = pneg %p344
      $region42: #{tpu_custom_call.1} parent=5 // pred_check_branch
        %347 = sbr.rel (%p345) target = $region44
      $region43: #{tpu_custom_call.1} parent=5 // pred_region
        // Predicated region
        $region45: #{tpu_custom_call.1} parent=43 // pred_check
          %p348 = pneg %p59
        $region46: #{tpu_custom_call.1} parent=43 // pred_check_branch
          %350 = sbr.rel (%p348) target = $region48
        $region47: #{tpu_custom_call.1} parent=43 // pred_region
          %s351 = sand.u32 %s49, 1
          %s352 = scalar_lea.sflag [#allocation6], %s351
          %s353 = sand.u32 %s49, 1
          %s354 = smul.addr %s353, 8
          %s355 = scalar_lea.vmem [#allocation5], %s354
          %s357 = ssub.s32 128, 128
          %358 = vsyncadd %s352, %s357
          %s359 = smul.addr %s34, 128
          %s360 = scalar_lea.hbm %s0, %s359
          %s362 = sshll.u32 %s355, 4
          %s363 = int_to_ptr.vmem [resolvable:$true] %s362
          %365 = dma.hbm_to_vmem [thread:$0]  %s360, 128, %s363, %s352
        $region48: #{tpu_custom_call.1} parent=43 // pred_fallthru
          _
      $region44: #{tpu_custom_call.1} parent=5 // pred_fallthru
        _
      %p366 = scmp.le.s32.totalorder 1, %s27
      %p367 = scmp.lt.s32.totalorder %s27, 3
      %p368 = pnand %p366, %p367
      %p369 = pneg %p368
      // Predicated region
      $region49: #{tpu_custom_call.1} parent=5 // pred_check
        _
      $region50: #{tpu_custom_call.1} parent=5 // pred_check_branch
        %371 = sbr.rel (%p368) target = $region52
      $region51: #{tpu_custom_call.1} parent=5 // pred_region
        %s372 = ssub.s32 %s27, 1
        %s373 = sand.u32 %s52, 1
        %s374 = scalar_lea.sflag [#allocation6], %s373
        %s375 = sand.u32 %s52, 1
        %s376 = smul.addr %s375, 8
        %s377 = scalar_lea.vmem [#allocation5], %s376
        // Predicated region
        $region53: #{tpu_custom_call.1} parent=51 // pred_check
          %p378 = pneg %p65
        $region54: #{tpu_custom_call.1} parent=51 // pred_check_branch
          %380 = sbr.rel (%p378) target = $region56
        $region55: #{tpu_custom_call.1} parent=51 // pred_region
          %381 = dma.done %s374, 128
        $region56: #{tpu_custom_call.1} parent=51 // pred_fallthru
          _
        // Predicated region
        $region57: #{tpu_custom_call.1} parent=51 // pred_check
          %p382 = pneg %p128
        $region58: #{tpu_custom_call.1} parent=51 // pred_check_branch
          %384 = sbr.rel (%p382) target = $region60
        $region59: #{tpu_custom_call.1} parent=51 // pred_region
          %385 = dma.done [#allocation9], 512
        $region60: #{tpu_custom_call.1} parent=51 // pred_fallthru
          _
        // Predicated region
        $region61: #{tpu_custom_call.1} parent=51 // pred_check
          %p386 = pneg %p149
        $region62: #{tpu_custom_call.1} parent=51 // pred_check_branch
          %388 = sbr.rel (%p386) target = $region64
        $region63: #{tpu_custom_call.1} parent=51 // pred_region
          %389 = dma.done [#allocation9], 512
        $region64: #{tpu_custom_call.1} parent=51 // pred_fallthru
          _
        // Predicated region
        $region65: #{tpu_custom_call.1} parent=51 // pred_check
          %p390 = pneg %p170
        $region66: #{tpu_custom_call.1} parent=51 // pred_check_branch
          %392 = sbr.rel (%p390) target = $region68
        $region67: #{tpu_custom_call.1} parent=51 // pred_region
          %393 = dma.done [#allocation12], 512
        $region68: #{tpu_custom_call.1} parent=51 // pred_fallthru
          _
        // Predicated region
        $region69: #{tpu_custom_call.1} parent=51 // pred_check
          %p394 = pneg %p191
        $region70: #{tpu_custom_call.1} parent=51 // pred_check_branch
          %396 = sbr.rel (%p394) target = $region72
        $region71: #{tpu_custom_call.1} parent=51 // pred_region
          %397 = dma.done [#allocation12], 512
        $region72: #{tpu_custom_call.1} parent=51 // pred_fallthru
          _
        %s398 = sand.u32 %s52, 1
        %s399 = scalar_lea.sflag [#allocation6], %s398
        %s400 = sand.u32 %s52, 1
        %s401 = smul.addr %s400, 8
        %s402 = scalar_lea.vmem [#allocation5], %s401
        %p403 = pneg %p65
        %p404 = pneg %p62
        %p405 = pneg %p86
        %p406 = pneg %p83
        %p407 = pneg %p107
        %p408 = pneg %p104
        %p409 = pneg %p128
        %p410 = pneg %p125
        %p411 = pneg %p149
        %p412 = pneg %p146
        %p413 = pneg %p170
        %p414 = pneg %p167
        %p415 = pneg %p191
        %p416 = pneg %p188
        %p417 = pneg %p212
        %p418 = pneg %p209
        %p419 = pneg %p240
        %p420 = pneg %p237
        %s421 = sand.u32 %s227, 1
        %s422 = scalar_lea.sflag [#allocation7], %s421
        %s423 = sand.u32 %s227, 1
        %s424 = smul.addr %s423, 8
        %s425 = scalar_lea.vmem [#allocation14], %s424
        %p426 = pneg %p268
        %p427 = pneg %p265
        %s428 = sand.u32 %s255, 1
        %s429 = scalar_lea.sflag [#allocation16], %s428
        %s430 = sand.u32 %s255, 1
        %s431 = smul.addr %s430, 8
        %s432 = scalar_lea.vmem [#allocation15], %s431
        %p433 = scmp.eq.s32.totalorder %s37, 0
        // Predicated region
        $region73: #{tpu_custom_call.1} parent=51 // pred_check
          %p434 = pneg %p433
        $region74: #{tpu_custom_call.1} parent=51 // pred_check_branch
          %436 = sbr.rel (%p434) target = $region76
        $region75: #{tpu_custom_call.1} parent=51 // pred_region
          %v437 = vld [vmem:[%s377] sm:$0xff]
          %vm438 = vcmask 261120
          %v439 = vsel %vm438, %v437, 0.0
          %440 = vadd.xlane.f32.xlu0 %v439
          %v441 = vpop.xlane.xlu0 %440
          %v442 = vrcp.pop 32.0
          %v443 = vmul.f32 %v441, %v442
          %v444 = vsub.f32 %v437, %v443
          %v445 = vmul.f32 %v444, %v444
          %v446 = vsel %vm438, %v445, 0.0
          %447 = vadd.xlane.f32.xlu0 %v446
          %v448 = vpop.xlane.xlu0 %447
          %v449 = vmul.f32 %v448, %v442
          %v450 = vadd.f32 %v449, 1e-05
          %v451 = vrsqrt.pop %v450
          %v452 = vmul.f32 %v444, %v451
          %v453 = vld [vmem:[%s1] sm:$0x1]
          %v455 = vlaneseq
          %v456 = vshrl.u32 %v455, 7
          %v457 = vsub.s32 0, %v456
          %v458 = vrot.slane %v453, %v457
          %v460 = vmul.f32 %v452, %v458
          %v461 = vld [vmem:[%s2] sm:$0x1]
          %v463 = vlaneseq
          %v464 = vshrl.u32 %v463, 7
          %v465 = vsub.s32 0, %v464
          %v466 = vrot.slane %v461, %v465
          %v468 = vadd.f32 %v460, %v466
          %v469 = vld [vmem:[#allocation8] sm:$0xff]
          %v470 = vld [vmem:[#allocation8 + $0x8] sm:$0xff]
          %v471 = vld [vmem:[#allocation8 + $0x10] sm:$0xff]
          %v472 = vld [vmem:[#allocation8 + $0x18] sm:$0xff]
          %v474 = vsel %vm438, %v468, 0
          %476 = vmatprep.subr.mxu0 0.0
          %477 = vmatpush1.msra.mxu0 0.0
          %478 = vmatprep.subr.mxu0 0.0
          %479 = vmatpush1.msra.mxu0 0.0
          %480 = vmatprep.subr.mxu0 0.0
          %481 = vmatpush1.msra.mxu0 0.0
          %482 = vmatprep.subr.mxu0 0.0
          %483 = vmatpush1.msra.mxu0 0.0
          %484 = vmatprep.subr.mxu0 0.0
          %485 = vmatpush1.msra.mxu0 0.0
          %486 = vmatprep.subr.mxu0 0.0
          %487 = vmatpush1.msra.mxu0 0.0
          %488 = vmatprep.subr.mxu0 0.0
          %489 = vmatpush1.msra.mxu0 0.0
          %490 = vmatprep.subr.mxu0 0.0
          %491 = vmatpush1.msra.mxu0 0.0
          %492 = vmatprep.subr.mxu0 0.0
          %493 = vmatpush1.msra.mxu0 0.0
          %494 = vmatprep.subr.mxu0 0.0
          %495 = vmatpush1.msra.mxu0 0.0
          %496 = vmatprep.subr.mxu0 0.0
          %497 = vmatpush1.msra.mxu0 0.0
          %498 = vmatprep.subr.mxu0 0.0
          %499 = vmatpush1.msra.mxu0 0.0
          %500 = vmatprep.subr.mxu0 0.0
          %501 = vmatpush1.msra.mxu0 %v472
          %502 = vmatprep.subr.mxu0 0.0
          %503 = vmatpush1.msra.mxu0 %v471
          %504 = vmatprep.subr.mxu0 0.0
          %505 = vmatpush1.msra.mxu0 %v470
          %506 = vmatprep.subr.mxu0 0.0
          %507 = vmatpush1.msra.mxu0 %v469
          %508 = vmatprep.subr.mxu0 0.0
          %509 = vmatpush2.msra.mxu0 0.0
          %510 = vmatprep.subr.mxu0 0.0
          %511 = vmatpush2.msra.mxu0 0.0
          %512 = vmatprep.subr.mxu0 0.0
          %513 = vmatpush2.msra.mxu0 0.0
          %514 = vmatprep.subr.mxu0 0.0
          %515 = vmatpush2.msra.mxu0 0.0
          %516 = vmatprep.subr.mxu0 0.0
          %517 = vmatpush2.msra.mxu0 0.0
          %518 = vmatprep.subr.mxu0 0.0
          %519 = vmatpush2.msra.mxu0 0.0
          %520 = vmatprep.subr.mxu0 0.0
          %521 = vmatpush2.msra.mxu0 0.0
          %522 = vmatprep.subr.mxu0 0.0
          %523 = vmatpush2.msra.mxu0 0.0
          %524 = vmatprep.subr.mxu0 0.0
          %525 = vmatpush2.msra.mxu0 0.0
          %526 = vmatprep.subr.mxu0 0.0
          %527 = vmatpush2.msra.mxu0 0.0
          %528 = vmatprep.subr.mxu0 0.0
          %529 = vmatpush2.msra.mxu0 0.0
          %530 = vmatprep.subr.mxu0 0.0
          %531 = vmatpush2.msra.mxu0 0.0
          %532 = vmatprep.subr.mxu0 0.0
          %533 = vmatpush2.msra.mxu0 0.0
          %534 = vmatprep.subr.mxu0 0.0
          %535 = vmatpush2.msra.mxu0 0.0
          %536 = vmatprep.subr.mxu0 0.0
          %537 = vmatpush2.msra.mxu0 0.0
          %538 = vmatprep.subr.mxu0 0.0
          %539 = vmatpush2.msra.mxu0 0.0
          %540 = vmatprep.mubr.f32.mxu0 0.0
          %541 = vmatmul.mubr.f32.gmra.mxu0 %v474
          %v542 = vpop.f32.mrf.mxu0
          %v543 = vadd.f32 0.0, %v542
          %v544 = vpop.f32.mrf.mxu0
          %545 = vdwg.mxu0
          %546 = vst.msk [vmem:[#allocation2] sm:$0xff] %vm438, %v543
          %v547 = vld [vmem:[#allocation10] sm:$0xff]
          %v548 = vld [vmem:[#allocation10 + $0x8] sm:$0xff]
          %v549 = vld [vmem:[#allocation10 + $0x10] sm:$0xff]
          %v550 = vld [vmem:[#allocation10 + $0x18] sm:$0xff]
          %551 = vmatprep.subr.mxu0 0.0
          %552 = vmatpush1.msra.mxu0 0.0
          %553 = vmatprep.subr.mxu0 0.0
          %554 = vmatpush1.msra.mxu0 0.0
          %555 = vmatprep.subr.mxu0 0.0
          %556 = vmatpush1.msra.mxu0 0.0
          %557 = vmatprep.subr.mxu0 0.0
          %558 = vmatpush1.msra.mxu0 0.0
          %559 = vmatprep.subr.mxu0 0.0
          %560 = vmatpush1.msra.mxu0 0.0
          %561 = vmatprep.subr.mxu0 0.0
          %562 = vmatpush1.msra.mxu0 0.0
          %563 = vmatprep.subr.mxu0 0.0
          %564 = vmatpush1.msra.mxu0 0.0
          %565 = vmatprep.subr.mxu0 0.0
          %566 = vmatpush1.msra.mxu0 0.0
          %567 = vmatprep.subr.mxu0 0.0
          %568 = vmatpush1.msra.mxu0 0.0
          %569 = vmatprep.subr.mxu0 0.0
          %570 = vmatpush1.msra.mxu0 0.0
          %571 = vmatprep.subr.mxu0 0.0
          %572 = vmatpush1.msra.mxu0 0.0
          %573 = vmatprep.subr.mxu0 0.0
          %574 = vmatpush1.msra.mxu0 0.0
          %575 = vmatprep.subr.mxu0 0.0
          %576 = vmatpush1.msra.mxu0 %v550
          %577 = vmatprep.subr.mxu0 0.0
          %578 = vmatpush1.msra.mxu0 %v549
          %579 = vmatprep.subr.mxu0 0.0
          %580 = vmatpush1.msra.mxu0 %v548
          %581 = vmatprep.subr.mxu0 0.0
          %582 = vmatpush1.msra.mxu0 %v547
          %583 = vmatprep.subr.mxu0 0.0
          %584 = vmatpush2.msra.mxu0 0.0
          %585 = vmatprep.subr.mxu0 0.0
          %586 = vmatpush2.msra.mxu0 0.0
          %587 = vmatprep.subr.mxu0 0.0
          %588 = vmatpush2.msra.mxu0 0.0
          %589 = vmatprep.subr.mxu0 0.0
          %590 = vmatpush2.msra.mxu0 0.0
          %591 = vmatprep.subr.mxu0 0.0
          %592 = vmatpush2.msra.mxu0 0.0
          %593 = vmatprep.subr.mxu0 0.0
          %594 = vmatpush2.msra.mxu0 0.0
          %595 = vmatprep.subr.mxu0 0.0
          %596 = vmatpush2.msra.mxu0 0.0
          %597 = vmatprep.subr.mxu0 0.0
          %598 = vmatpush2.msra.mxu0 0.0
          %599 = vmatprep.subr.mxu0 0.0
          %600 = vmatpush2.msra.mxu0 0.0
          %601 = vmatprep.subr.mxu0 0.0
          %602 = vmatpush2.msra.mxu0 0.0
          %603 = vmatprep.subr.mxu0 0.0
          %604 = vmatpush2.msra.mxu0 0.0
          %605 = vmatprep.subr.mxu0 0.0
          %606 = vmatpush2.msra.mxu0 0.0
          %607 = vmatprep.subr.mxu0 0.0
          %608 = vmatpush2.msra.mxu0 0.0
          %609 = vmatprep.subr.mxu0 0.0
          %610 = vmatpush2.msra.mxu0 0.0
          %611 = vmatprep.subr.mxu0 0.0
          %612 = vmatpush2.msra.mxu0 0.0
          %613 = vmatprep.subr.mxu0 0.0
          %614 = vmatpush2.msra.mxu0 0.0
          %615 = vmatprep.mubr.f32.mxu0 0.0
          %616 = vmatmul.mubr.f32.gmra.mxu0 %v474
          %v617 = vpop.f32.mrf.mxu0
          %v618 = vadd.f32 0.0, %v617
          %v619 = vpop.f32.mrf.mxu0
          %620 = vdwg.mxu0
          %621 = vst.msk [vmem:[#allocation3] sm:$0xff] %vm438, %v618
          %v622 = vld [vmem:[#allocation11] sm:$0xff]
          %v623 = vld [vmem:[#allocation11 + $0x8] sm:$0xff]
          %v624 = vld [vmem:[#allocation11 + $0x10] sm:$0xff]
          %v625 = vld [vmem:[#allocation11 + $0x18] sm:$0xff]
          %626 = vmatprep.subr.mxu0 0.0
          %627 = vmatpush1.msra.mxu0 0.0
          %628 = vmatprep.subr.mxu0 0.0
          %629 = vmatpush1.msra.mxu0 0.0
          %630 = vmatprep.subr.mxu0 0.0
          %631 = vmatpush1.msra.mxu0 0.0
          %632 = vmatprep.subr.mxu0 0.0
          %633 = vmatpush1.msra.mxu0 0.0
          %634 = vmatprep.subr.mxu0 0.0
          %635 = vmatpush1.msra.mxu0 0.0
          %636 = vmatprep.subr.mxu0 0.0
          %637 = vmatpush1.msra.mxu0 0.0
          %638 = vmatprep.subr.mxu0 0.0
          %639 = vmatpush1.msra.mxu0 0.0
          %640 = vmatprep.subr.mxu0 0.0
          %641 = vmatpush1.msra.mxu0 0.0
          %642 = vmatprep.subr.mxu0 0.0
          %643 = vmatpush1.msra.mxu0 0.0
          %644 = vmatprep.subr.mxu0 0.0
          %645 = vmatpush1.msra.mxu0 0.0
          %646 = vmatprep.subr.mxu0 0.0
          %647 = vmatpush1.msra.mxu0 0.0
          %648 = vmatprep.subr.mxu0 0.0
          %649 = vmatpush1.msra.mxu0 0.0
          %650 = vmatprep.subr.mxu0 0.0
          %651 = vmatpush1.msra.mxu0 %v625
          %652 = vmatprep.subr.mxu0 0.0
          %653 = vmatpush1.msra.mxu0 %v624
          %654 = vmatprep.subr.mxu0 0.0
          %655 = vmatpush1.msra.mxu0 %v623
          %656 = vmatprep.subr.mxu0 0.0
          %657 = vmatpush1.msra.mxu0 %v622
          %658 = vmatprep.subr.mxu0 0.0
          %659 = vmatpush2.msra.mxu0 0.0
          %660 = vmatprep.subr.mxu0 0.0
          %661 = vmatpush2.msra.mxu0 0.0
          %662 = vmatprep.subr.mxu0 0.0
          %663 = vmatpush2.msra.mxu0 0.0
          %664 = vmatprep.subr.mxu0 0.0
          %665 = vmatpush2.msra.mxu0 0.0
          %666 = vmatprep.subr.mxu0 0.0
          %667 = vmatpush2.msra.mxu0 0.0
          %668 = vmatprep.subr.mxu0 0.0
          %669 = vmatpush2.msra.mxu0 0.0
          %670 = vmatprep.subr.mxu0 0.0
          %671 = vmatpush2.msra.mxu0 0.0
          %672 = vmatprep.subr.mxu0 0.0
          %673 = vmatpush2.msra.mxu0 0.0
          %674 = vmatprep.subr.mxu0 0.0
          %675 = vmatpush2.msra.mxu0 0.0
          %676 = vmatprep.subr.mxu0 0.0
          %677 = vmatpush2.msra.mxu0 0.0
          %678 = vmatprep.subr.mxu0 0.0
          %679 = vmatpush2.msra.mxu0 0.0
          %680 = vmatprep.subr.mxu0 0.0
          %681 = vmatpush2.msra.mxu0 0.0
          %682 = vmatprep.subr.mxu0 0.0
          %683 = vmatpush2.msra.mxu0 0.0
          %684 = vmatprep.subr.mxu0 0.0
          %685 = vmatpush2.msra.mxu0 0.0
          %686 = vmatprep.subr.mxu0 0.0
          %687 = vmatpush2.msra.mxu0 0.0
          %688 = vmatprep.subr.mxu0 0.0
          %689 = vmatpush2.msra.mxu0 0.0
          %690 = vmatprep.mubr.f32.mxu0 0.0
          %691 = vmatmul.mubr.f32.gmra.mxu0 %v474
          %v692 = vpop.f32.mrf.mxu0
          %v693 = vadd.f32 0.0, %v692
          %v694 = vpop.f32.mrf.mxu0
          %695 = vdwg.mxu0
          %696 = vst.msk [vmem:[#allocation4] sm:$0xff] %vm438, %v693
        $region76: #{tpu_custom_call.1} parent=51 // pred_fallthru
          _
        %s697 = smul.u32 %s37, 8
        %s698 = scalar_lea.vmem [#allocation2], %s697
        %v699 = vld [vmem:[%s698] sm:$0xff]
        %v700 = vld [vmem:[#allocation3] sm:$0xff]
        %vm701 = vcmask 261120
        %v703 = vsel %vm701, %v699, 0
        %v706 = vsel %vm701, %v700, 0
        %708 = vmatprep.subr.mxu0 0.0
        %709 = vmatpush1.xpose.msra.mxu0 0.0
        %710 = vmatprep.subr.mxu0 0.0
        %711 = vmatpush1.xpose.msra.mxu0 0.0
        %712 = vmatprep.subr.mxu0 0.0
        %713 = vmatpush1.xpose.msra.mxu0 0.0
        %714 = vmatprep.subr.mxu0 0.0
        %715 = vmatpush1.xpose.msra.mxu0 0.0
        %716 = vmatprep.subr.mxu0 0.0
        %717 = vmatpush1.xpose.msra.mxu0 0.0
        %718 = vmatprep.subr.mxu0 0.0
        %719 = vmatpush1.xpose.msra.mxu0 0.0
        %720 = vmatprep.subr.mxu0 0.0
        %721 = vmatpush1.xpose.msra.mxu0 0.0
        %722 = vmatprep.subr.mxu0 0.0
        %723 = vmatpush1.xpose.msra.mxu0 0.0
        %724 = vmatprep.subr.mxu0 0.0
        %725 = vmatpush1.xpose.msra.mxu0 0.0
        %726 = vmatprep.subr.mxu0 0.0
        %727 = vmatpush1.xpose.msra.mxu0 0.0
        %728 = vmatprep.subr.mxu0 0.0
        %729 = vmatpush1.xpose.msra.mxu0 0.0
        %730 = vmatprep.subr.mxu0 0.0
        %731 = vmatpush1.xpose.msra.mxu0 0.0
        %732 = vmatprep.subr.mxu0 0.0
        %733 = vmatpush1.xpose.msra.mxu0 0.0
        %734 = vmatprep.subr.mxu0 0.0
        %735 = vmatpush1.xpose.msra.mxu0 0.0
        %736 = vmatprep.subr.mxu0 0.0
        %737 = vmatpush1.xpose.msra.mxu0 0.0
        %738 = vmatprep.subr.mxu0 0.0
        %739 = vmatpush1.xpose.msra.mxu0 %v706
        %740 = vmatprep.subr.mxu0 0.0
        %741 = vmatpush2.xpose.msra.mxu0 0.0
        %742 = vmatprep.subr.mxu0 0.0
        %743 = vmatpush2.xpose.msra.mxu0 0.0
        %744 = vmatprep.subr.mxu0 0.0
        %745 = vmatpush2.xpose.msra.mxu0 0.0
        %746 = vmatprep.subr.mxu0 0.0
        %747 = vmatpush2.xpose.msra.mxu0 0.0
        %748 = vmatprep.subr.mxu0 0.0
        %749 = vmatpush2.xpose.msra.mxu0 0.0
        %750 = vmatprep.subr.mxu0 0.0
        %751 = vmatpush2.xpose.msra.mxu0 0.0
        %752 = vmatprep.subr.mxu0 0.0
        %753 = vmatpush2.xpose.msra.mxu0 0.0
        %754 = vmatprep.subr.mxu0 0.0
        %755 = vmatpush2.xpose.msra.mxu0 0.0
        %756 = vmatprep.subr.mxu0 0.0
        %757 = vmatpush2.xpose.msra.mxu0 0.0
        %758 = vmatprep.subr.mxu0 0.0
        %759 = vmatpush2.xpose.msra.mxu0 0.0
        %760 = vmatprep.subr.mxu0 0.0
        %761 = vmatpush2.xpose.msra.mxu0 0.0
        %762 = vmatprep.subr.mxu0 0.0
        %763 = vmatpush2.xpose.msra.mxu0 0.0
        %764 = vmatprep.subr.mxu0 0.0
        %765 = vmatpush2.xpose.msra.mxu0 0.0
        %766 = vmatprep.subr.mxu0 0.0
        %767 = vmatpush2.xpose.msra.mxu0 0.0
        %768 = vmatprep.subr.mxu0 0.0
        %769 = vmatpush2.xpose.msra.mxu0 0.0
        %770 = vmatprep.subr.mxu0 0.0
        %771 = vmatpush2.xpose.msra.mxu0 0.0
        %772 = vmatprep.mubr.f32.mxu0 0.0
        %773 = vmatmul.mubr.f32.gmra.mxu0 %v703
        %v774 = vpop.f32.mrf.mxu0
        %v775 = vadd.f32 0.0, %v774
        %v776 = vpop.f32.mrf.mxu0
        %777 = vdwg.mxu0
        %v778 = vmul.f32 %v775, 0.17677669
        %v779 = vlaneseq
        %v780 = vshrl.u32 %v779, 7
        %v781 = vstv %s697
        %v782 = vadd.s32 %v781, %v780
        %v783 = vlaneseq
        %v784 = vand.u32 %v783, 127
        %vm785 = vcmp.gt.s32.totalorder %v784, %v782
        %v786 = vsel %vm785, -3.4028235e+38, %v778
        %vm787 = vcmask 64512
        %v788 = vsel %vm787, %v786, -inf
        %789 = vmax.xlane.f32.xlu0 %v788
        %v790 = vpop.xlane.xlu0 %789
        %v791 = vsub.f32 %v786, %v790
        %v792 = vmul.f32 %v791, 1.442695
        %v793 = vpow.pop %v792
        %v794 = vsel %vm787, %v793, 0.0
        %795 = vadd.xlane.f32.xlu0 %v794
        %v796 = vpop.xlane.xlu0 %795
        %v797 = vrcp.pop %v796
        %v798 = vmul.f32 %v793, %v797
        %799 = vst.msk [vmem:[%s432] sm:$0xff] %vm787, %v798
        %v800 = vld [vmem:[#allocation4] sm:$0xff]
        %v802 = vsel %vm787, %v798, 0
        %804 = vmatprep.subr.mxu0 0.0
        %805 = vmatpush1.msra.mxu0 0.0
        %806 = vmatprep.subr.mxu0 0.0
        %807 = vmatpush1.msra.mxu0 0.0
        %808 = vmatprep.subr.mxu0 0.0
        %809 = vmatpush1.msra.mxu0 0.0
        %810 = vmatprep.subr.mxu0 0.0
        %811 = vmatpush1.msra.mxu0 0.0
        %812 = vmatprep.subr.mxu0 0.0
        %813 = vmatpush1.msra.mxu0 0.0
        %814 = vmatprep.subr.mxu0 0.0
        %815 = vmatpush1.msra.mxu0 0.0
        %816 = vmatprep.subr.mxu0 0.0
        %817 = vmatpush1.msra.mxu0 0.0
        %818 = vmatprep.subr.mxu0 0.0
        %819 = vmatpush1.msra.mxu0 0.0
        %820 = vmatprep.subr.mxu0 0.0
        %821 = vmatpush1.msra.mxu0 0.0
        %822 = vmatprep.subr.mxu0 0.0
        %823 = vmatpush1.msra.mxu0 0.0
        %824 = vmatprep.subr.mxu0 0.0
        %825 = vmatpush1.msra.mxu0 0.0
        %826 = vmatprep.subr.mxu0 0.0
        %827 = vmatpush1.msra.mxu0 0.0
        %828 = vmatprep.subr.mxu0 0.0
        %829 = vmatpush1.msra.mxu0 0.0
        %830 = vmatprep.subr.mxu0 0.0
        %831 = vmatpush1.msra.mxu0 0.0
        %832 = vmatprep.subr.mxu0 0.0
        %833 = vmatpush1.msra.mxu0 0.0
        %834 = vmatprep.subr.mxu0 0.0
        %835 = vmatpush1.msra.mxu0 %v800
        %836 = vmatprep.subr.mxu0 0.0
        %837 = vmatpush2.msra.mxu0 0.0
        %838 = vmatprep.subr.mxu0 0.0
        %839 = vmatpush2.msra.mxu0 0.0
        %840 = vmatprep.subr.mxu0 0.0
        %841 = vmatpush2.msra.mxu0 0.0
        %842 = vmatprep.subr.mxu0 0.0
        %843 = vmatpush2.msra.mxu0 0.0
        %844 = vmatprep.subr.mxu0 0.0
        %845 = vmatpush2.msra.mxu0 0.0
        %846 = vmatprep.subr.mxu0 0.0
        %847 = vmatpush2.msra.mxu0 0.0
        %848 = vmatprep.subr.mxu0 0.0
        %849 = vmatpush2.msra.mxu0 0.0
        %850 = vmatprep.subr.mxu0 0.0
        %851 = vmatpush2.msra.mxu0 0.0
        %852 = vmatprep.subr.mxu0 0.0
        %853 = vmatpush2.msra.mxu0 0.0
        %854 = vmatprep.subr.mxu0 0.0
        %855 = vmatpush2.msra.mxu0 0.0
        %856 = vmatprep.subr.mxu0 0.0
        %857 = vmatpush2.msra.mxu0 0.0
        %858 = vmatprep.subr.mxu0 0.0
        %859 = vmatpush2.msra.mxu0 0.0
        %860 = vmatprep.subr.mxu0 0.0
        %861 = vmatpush2.msra.mxu0 0.0
        %862 = vmatprep.subr.mxu0 0.0
        %863 = vmatpush2.msra.mxu0 0.0
        %864 = vmatprep.subr.mxu0 0.0
        %865 = vmatpush2.msra.mxu0 0.0
        %866 = vmatprep.subr.mxu0 0.0
        %867 = vmatpush2.msra.mxu0 0.0
        %868 = vmatprep.mubr.f32.mxu0 0.0
        %869 = vmatmul.mubr.f32.gmra.mxu0 %v802
        %v870 = vpop.f32.mrf.mxu0
        %v871 = vadd.f32 0.0, %v870
        %v872 = vpop.f32.mrf.mxu0
        %873 = vdwg.mxu0
        %v874 = vld [vmem:[#allocation13] sm:$0xff]
        %v875 = vld [vmem:[#allocation13 + $0x8] sm:$0xff]
        %v876 = vld [vmem:[#allocation13 + $0x10] sm:$0xff]
        %v877 = vld [vmem:[#allocation13 + $0x18] sm:$0xff]
        %v878 = vld [vmem:[%s7] sm:$0x1]
        %v880 = vlaneseq
        %v881 = vshrl.u32 %v880, 7
        %v882 = vsub.s32 0, %v881
        %v883 = vrot.slane %v878, %v882
        %v886 = vsel %vm701, %v871, 0
        %888 = vmatprep.subr.mxu0 0.0
        %889 = vmatpush1.msra.mxu0 0.0
        %890 = vmatprep.subr.mxu0 0.0
        %891 = vmatpush1.msra.mxu0 0.0
        %892 = vmatprep.subr.mxu0 0.0
        %893 = vmatpush1.msra.mxu0 0.0
        %894 = vmatprep.subr.mxu0 0.0
        %895 = vmatpush1.msra.mxu0 0.0
        %896 = vmatprep.subr.mxu0 0.0
        %897 = vmatpush1.msra.mxu0 0.0
        %898 = vmatprep.subr.mxu0 0.0
        %899 = vmatpush1.msra.mxu0 0.0
        %900 = vmatprep.subr.mxu0 0.0
        %901 = vmatpush1.msra.mxu0 0.0
        %902 = vmatprep.subr.mxu0 0.0
        %903 = vmatpush1.msra.mxu0 0.0
        %904 = vmatprep.subr.mxu0 0.0
        %905 = vmatpush1.msra.mxu0 0.0
        %906 = vmatprep.subr.mxu0 0.0
        %907 = vmatpush1.msra.mxu0 0.0
        %908 = vmatprep.subr.mxu0 0.0
        %909 = vmatpush1.msra.mxu0 0.0
        %910 = vmatprep.subr.mxu0 0.0
        %911 = vmatpush1.msra.mxu0 0.0
        %912 = vmatprep.subr.mxu0 0.0
        %913 = vmatpush1.msra.mxu0 %v877
        %914 = vmatprep.subr.mxu0 0.0
        %915 = vmatpush1.msra.mxu0 %v876
        %916 = vmatprep.subr.mxu0 0.0
        %917 = vmatpush1.msra.mxu0 %v875
        %918 = vmatprep.subr.mxu0 0.0
        %919 = vmatpush1.msra.mxu0 %v874
        %920 = vmatprep.subr.mxu0 0.0
        %921 = vmatpush2.msra.mxu0 0.0
        %922 = vmatprep.subr.mxu0 0.0
        %923 = vmatpush2.msra.mxu0 0.0
        %924 = vmatprep.subr.mxu0 0.0
        %925 = vmatpush2.msra.mxu0 0.0
        %926 = vmatprep.subr.mxu0 0.0
        %927 = vmatpush2.msra.mxu0 0.0
        %928 = vmatprep.subr.mxu0 0.0
        %929 = vmatpush2.msra.mxu0 0.0
        %930 = vmatprep.subr.mxu0 0.0
        %931 = vmatpush2.msra.mxu0 0.0
        %932 = vmatprep.subr.mxu0 0.0
        %933 = vmatpush2.msra.mxu0 0.0
        %934 = vmatprep.subr.mxu0 0.0
        %935 = vmatpush2.msra.mxu0 0.0
        %936 = vmatprep.subr.mxu0 0.0
        %937 = vmatpush2.msra.mxu0 0.0
        %938 = vmatprep.subr.mxu0 0.0
        %939 = vmatpush2.msra.mxu0 0.0
        %940 = vmatprep.subr.mxu0 0.0
        %941 = vmatpush2.msra.mxu0 0.0
        %942 = vmatprep.subr.mxu0 0.0
        %943 = vmatpush2.msra.mxu0 0.0
        %944 = vmatprep.subr.mxu0 0.0
        %945 = vmatpush2.msra.mxu0 0.0
        %946 = vmatprep.subr.mxu0 0.0
        %947 = vmatpush2.msra.mxu0 0.0
        %948 = vmatprep.subr.mxu0 0.0
        %949 = vmatpush2.msra.mxu0 0.0
        %950 = vmatprep.subr.mxu0 0.0
        %951 = vmatpush2.msra.mxu0 0.0
        %952 = vmatprep.mubr.f32.mxu0 0.0
        %953 = vmatmul.mubr.f32.gmra.mxu0 %v886
        %v954 = vpop.f32.mrf.mxu0
        %v955 = vadd.f32 %v883, %v954
        %v956 = vpop.f32.mrf.mxu0
        %957 = vdwg.mxu0
        %958 = vst.msk [vmem:[%s425] sm:$0xff] %vm701, %v955
        %s959 = sand.u32 %s227, 1
        %s960 = scalar_lea.sflag [#allocation7], %s959
        %s961 = sand.u32 %s227, 1
        %s962 = smul.addr %s961, 8
        %s963 = scalar_lea.vmem [#allocation14], %s962
        %s964 = sand.u32 %s255, 1
        %s965 = scalar_lea.sflag [#allocation16], %s964
        %s966 = sand.u32 %s255, 1
        %s967 = smul.addr %s966, 8
        %s968 = scalar_lea.vmem [#allocation15], %s967
        // Predicated region
        $region77: #{tpu_custom_call.1} parent=51 // pred_check
          %p969 = pneg %p237
        $region78: #{tpu_custom_call.1} parent=51 // pred_check_branch
          %971 = sbr.rel (%p969) target = $region80
        $region79: #{tpu_custom_call.1} parent=51 // pred_region
          %s973 = ssub.s32 128, 128
          %974 = vsyncadd %s960, %s973
          %s975 = sadd.s32 %s37, %s36
          %s976 = smul.addr %s975, 128
          %s977 = scalar_lea.hbm %s8, %s976
          %s979 = sshll.u32 %s963, 4
          %s980 = int_to_ptr.vmem [resolvable:$true] %s979
          %982 = dma.vmem_to_hbm [thread:$0]  %s980, 128, %s977, %s960
        $region80: #{tpu_custom_call.1} parent=51 // pred_fallthru
          _
        // Predicated region
        $region81: #{tpu_custom_call.1} parent=51 // pred_check
          %p983 = pneg %p265
        $region82: #{tpu_custom_call.1} parent=51 // pred_check_branch
          %985 = sbr.rel (%p983) target = $region84
        $region83: #{tpu_custom_call.1} parent=51 // pred_region
          %s987 = ssub.s32 128, 128
          %988 = vsyncadd %s965, %s987
          %s989 = sadd.s32 %s37, %s36
          %s990 = smul.addr %s989, 128
          %s991 = scalar_lea.hbm %s9, %s990
          %s993 = sshll.u32 %s968, 4
          %s994 = int_to_ptr.vmem [resolvable:$true] %s993
          %996 = dma.vmem_to_hbm [thread:$0]  %s994, 128, %s991, %s965
        $region84: #{tpu_custom_call.1} parent=51 // pred_fallthru
          _
      $region52: #{tpu_custom_call.1} parent=5 // pred_fallthru
        _
      %p997 = scmp.le.s32.totalorder 2, %s27
      // Predicated region
      $region85: #{tpu_custom_call.1} parent=5 // pred_check
        %p998 = pneg %p997
      $region86: #{tpu_custom_call.1} parent=5 // pred_check_branch
        %1000 = sbr.rel (%p998) target = $region88
      $region87: #{tpu_custom_call.1} parent=5 // pred_region
        %s1001 = ssub.s32 %s27, 2
        // Predicated region
        $region89: #{tpu_custom_call.1} parent=87 // pred_check
          %p1002 = pneg %p243
        $region90: #{tpu_custom_call.1} parent=87 // pred_check_branch
          %1004 = sbr.rel (%p1002) target = $region92
        $region91: #{tpu_custom_call.1} parent=87 // pred_region
          %s1005 = sand.u32 %s228, 1
          %s1006 = scalar_lea.sflag [#allocation7], %s1005
          %s1007 = sand.u32 %s228, 1
          %s1008 = smul.addr %s1007, 8
          %s1009 = scalar_lea.vmem [#allocation14], %s1008
          %1010 = dma.done %s1006, 128
        $region92: #{tpu_custom_call.1} parent=87 // pred_fallthru
          _
        // Predicated region
        $region93: #{tpu_custom_call.1} parent=87 // pred_check
          %p1011 = pneg %p271
        $region94: #{tpu_custom_call.1} parent=87 // pred_check_branch
          %1013 = sbr.rel (%p1011) target = $region96
        $region95: #{tpu_custom_call.1} parent=87 // pred_region
          %s1014 = sand.u32 %s256, 1
          %s1015 = scalar_lea.sflag [#allocation16], %s1014
          %s1016 = sand.u32 %s256, 1
          %s1017 = smul.addr %s1016, 8
          %s1018 = scalar_lea.vmem [#allocation15], %s1017
          %1019 = dma.done %s1015, 128
        $region96: #{tpu_custom_call.1} parent=87 // pred_fallthru
          _
      $region88: #{tpu_custom_call.1} parent=5 // pred_fallthru
        _
    $region6: #{tpu_custom_call.1} parent=1 // loop_footer
      %s31 = sadd.s32 1, %s27
    $region7: #{tpu_custom_call.1} parent=1 // loop_footer_branch
      %26 = sbr.rel target = $region3
    $region8: #{tpu_custom_call.1} parent=1 // loop_exit
      _
    %1020 = vsyncpa [#allocation6], 1
    %s1021 = scalar_lea.sflag [#allocation6], 1
    %1022 = vsyncpa %s1021, 1
    %1023 = vsyncpa [#allocation9], 1
    %1024 = vsyncpa [#allocation12], 1
    %1025 = vsyncpa [#allocation7], 1
    %s1026 = scalar_lea.sflag [#allocation7], 1
    %1027 = vsyncpa %s1026, 1
    %1028 = vsyncpa [#allocation16], 1
    %s1029 = scalar_lea.sflag [#allocation16], 1
    %1030 = vsyncpa %s1029, 1

</llo_original>
